<compile_context>
chip_gen: v7x
topology: tpu7x:2x2x1
jax: 0.10.0
libtpu: 0.0.40
codegen_flags: <defaults>
</compile_context>

<pallas_src>
import jax
import jax.numpy as jnp
from jax.experimental import pallas as pl
from jax.experimental.pallas import tpu as pltpu


# ------------------------- fused forward Pallas kernel -------------------------

def _build_fused_kernel(n_enc, n_dec, batch):
    """Builds the fused ladder-forward kernel.

    n_enc : number of encoder linear layers (= n_layers + 1)
    n_dec : number of decoder layers including the bottom (no-V) one (= n_enc + 1)
    batch : B (kernel operates on 2B rows: clean rows [:B], noisy rows [B:])
    """

    def kernel(*refs):
        it = iter(refs)
        x2_ref = next(it)                                    # (2B, d_in) clean|noisy input
        noise_refs = [next(it) for _ in range(n_enc)]        # (2B, d_l), clean half zeroed
        enc_w = [next(it) for _ in range(n_enc)]             # (d_in_l, d_out_l)
        enc_b = [next(it) for _ in range(n_enc)]             # (1, d_out_l)
        dec_amu = [next(it) for _ in range(n_dec)]           # (5, d) -> a1..a5
        dec_av = [next(it) for _ in range(n_dec)]            # (5, d) -> a6..a10
        dec_w = [next(it) for _ in range(n_dec - 1)]         # V weights
        dec_b = [next(it) for _ in range(n_dec - 1)]         # V biases
        clean_out_ref = next(it)                             # (B, d_out)
        loss_ref = next(it)                                  # (1, 1)
        assert next(it, None) is None

        B = batch

        # ---------------- encoder: one (2B, d) GEMM per layer ----------------
        h = x2_ref[...]
        buffers = [h]                         # pre-activation (post-noise) caches
        for l in range(n_enc):
            z = jnp.dot(h, enc_w[l][...], preferred_element_type=jnp.float32)
            # fused epilogue: bias + per-layer noise (noise rows [:B] are zero)
            z = z + enc_b[l][...] + noise_refs[l][...]
            buffers.append(z)
            # ReLU on all but the last encoder layer (matches the reference module)
            h = jnp.maximum(z, 0.0) if l < n_enc - 1 else z

        clean_bufs = [b[:B] for b in buffers]
        noisy_bufs = [b[B:] for b in buffers]

        # ---------------- decoder ----------------
        def g(tz, u, amu_ref, av_ref):
            amu = amu_ref[...]
            av = av_ref[...]
            a1, a2, a3, a4, a5 = (amu[k:k + 1] for k in range(5))
            a6, a7, a8, a9, a10 = (av[k:k + 1] for k in range(5))
            mu = a1 * jax.nn.sigmoid(a2 * u + a3) + a4 * u + a5
            v = a6 * jax.nn.sigmoid(a7 * u + a8) + a9 * u + a10
            return (tz - mu) * v + mu

        tilde = noisy_bufs[::-1]
        # top = noisy encoder output == tilde[0] (last encoder layer has no
        # activation) -- this mirrors the reference PyTorch Decoder exactly.
        top = tilde[0]
        hat_z = []
        for j in range(n_dec - 1):
            hz = g(tilde[j], top, dec_amu[j], dec_av[j])
            hat_z.append(hz)
            top = (jnp.dot(hz, dec_w[j][...], preferred_element_type=jnp.float32)
                   + dec_b[j][...])
        hat_z.append(g(tilde[-1], top, dec_amu[-1], dec_av[-1]))

        # ---------------- unsupervised ladder loss ----------------
        n = len(hat_z)
        loss = jnp.float32(0.0)
        for i in range(n):
            diff = clean_bufs[i] - hat_z[n - 1 - i]
            loss = loss + jnp.sum(diff * diff) / float(diff.size)   # reduction='mean'

        clean_out_ref[...] = clean_bufs[-1]
        loss_ref[...] = jnp.full((1, 1), loss, dtype=jnp.float32)

    return kernel


def ladder_forward(x, enc_params, dec_params, noise_in, layer_noise):
    """Single fused pallas_call for the full LadderNetwork forward.

    Returns (clean_out (B, d_out), ladder_loss scalar)."""
    B, d_in = x.shape
    n_enc = len(enc_params)
    n_dec = len(dec_params)
    d_out = enc_params[-1][0].shape[1]

    # Batch the clean and noisy passes: rows [:B] clean, rows [B:] noisy.
    x2 = jnp.concatenate([x, x + noise_in], axis=0)
    noise2 = [jnp.concatenate([jnp.zeros_like(nz), nz], axis=0) for nz in layer_noise]

    enc_w = [w for (w, _) in enc_params]
    enc_b = [b for (_, b) in enc_params]
    dec_amu = [p[0] for p in dec_params]
    dec_av = [p[1] for p in dec_params]
    dec_w = [p[2] for p in dec_params[:-1]]
    dec_b = [p[3] for p in dec_params[:-1]]

    operands = [x2] + noise2 + enc_w + enc_b + dec_amu + dec_av + dec_w + dec_b

    def full_spec(a):
        nd = a.ndim
        return pl.BlockSpec(a.shape, lambda i, _nd=nd: (0,) * _nd)

    kernel = _build_fused_kernel(n_enc, n_dec, B)

    clean_out, loss = pl.pallas_call(
        kernel,
        out_shape=(jax.ShapeDtypeStruct((B, d_out), jnp.float32),
                   jax.ShapeDtypeStruct((1, 1), jnp.float32)),
        grid=(1,),
        in_specs=[full_spec(a) for a in operands],
        out_specs=(pl.BlockSpec((B, d_out), lambda i: (0, 0)),
                   pl.BlockSpec((1, 1), lambda i: (0, 0))),
        compiler_params=pltpu.CompilerParams(dimension_semantics=("arbitrary",)),
    )(*operands)
    return clean_out, loss[0, 0]


# ----------------------------- pure-JAX reference ------------------------------

def ladder_forward_ref(x, enc_params, dec_params, noise_in, layer_noise):
    def encoder(h, noisy):
        if noisy:
            h = h + noise_in
        buf = [h]
        n = len(enc_params)
        for i, (w, b) in enumerate(enc_params):
            z = h @ w + b
            if noisy:
                z = z + layer_noise[i]
            buf.append(z)
            h = jax.nn.relu(z) if i < n - 1 else z
        return h, buf

    clean_out, clean_buf = encoder(x, False)
    noisy_out, noisy_buf = encoder(x, True)

    def g(tz, u, a_mu, a_v):
        a1, a2, a3, a4, a5 = (a_mu[k:k + 1] for k in range(5))
        a6, a7, a8, a9, a10 = (a_v[k:k + 1] for k in range(5))
        mu = a1 * jax.nn.sigmoid(a2 * u + a3) + a4 * u + a5
        v = a6 * jax.nn.sigmoid(a7 * u + a8) + a9 * u + a10
        return (tz - mu) * v + mu

    tilde = noisy_buf[::-1]
    top = noisy_out
    hat_z = []
    for j, (a_mu, a_v, w, b) in enumerate(dec_params[:-1]):
        hz = g(tilde[j], top, a_mu, a_v)
        hat_z.append(hz)
        top = hz @ w + b
    a_mu, a_v, _, _ = dec_params[-1]
    hat_z.append(g(tilde[-1], top, a_mu, a_v))

    loss = 0.0
    n = len(hat_z)
    for i in range(n):
        loss = loss + jnp.mean((clean_buf[i] - hat_z[n - 1 - i]) ** 2)
    return clean_out, loss


# ----------------------------- parameter creation -------------------------------

def xavier_uniform(key, d_in, d_out):
    limit = (6.0 / (d_in + d_out)) ** 0.5
    # PyTorch stores (d_out, d_in); we store the transpose (d_in, d_out).
    return jax.random.uniform(key, (d_in, d_out), jnp.float32, -limit, limit)


def make_params(key, d_in, hidden, d_out, n_layers, enc_bias=True, dec_bias=True):
    keys = iter(jax.random.split(key, 64))

    # Encoder: n_layers + 1 linear layers
    enc_dims = [d_in] + [hidden] * n_layers + [d_out]
    enc_params = []
    for i in range(len(enc_dims) - 1):
        w = xavier_uniform(next(keys), enc_dims[i], enc_dims[i + 1])
        b = (jnp.full((1, enc_dims[i + 1]), 0.01, jnp.float32) if enc_bias
             else jnp.zeros((1, enc_dims[i + 1]), jnp.float32))
        enc_params.append((w, b))

    # Decoder: stacked layers (d_out->hidden, hidden->hidden..., hidden->d_in),
    # plus bottom decoder (d_in, None).
    dec_in = [d_out] + [hidden] * n_layers + [d_in]
    dec_out = [hidden] * n_layers + [d_in] + [None]
    # DecoderLayer defaults: a2 = a7 = 1, the rest 0; add a small deterministic
    # perturbation so the combinator math is actually exercised.
    base = jnp.array([0.0, 1.0, 0.0, 0.0, 0.0], jnp.float32)
    dec_params = []
    for din, dout in zip(dec_in, dec_out):
        a_mu = base[:, None] + 0.1 * jax.random.normal(next(keys), (5, din), jnp.float32)
        a_v = base[:, None] + 0.1 * jax.random.normal(next(keys), (5, din), jnp.float32)
        if dout is not None:
            w = xavier_uniform(next(keys), din, dout)
            b = (jnp.full((1, dout), 0.01, jnp.float32) if dec_bias
                 else jnp.zeros((1, dout), jnp.float32))
        else:
            w, b = None, None
        dec_params.append((a_mu, a_v, w, b))
    return enc_params, dec_params


# ------------------------------------ main ---------------------------------------

if __name__ == "__main__":
    d_in, hidden, d_out, n_layers = 16, 32, 8, 2
    batch = 8
    noise_std = 0.01

    key = jax.random.PRNGKey(0)
    k_x, k_params, k_noise = jax.random.split(key, 3)

    x = jax.random.normal(k_x, (batch, d_in), jnp.float32)
    enc_params, dec_params = make_params(k_params, d_in, hidden, d_out, n_layers)

    # Deterministic stand-in for np.random.normal in forward_noisy: one noise
    # tensor for the input + one per encoder layer, passed into the kernel.
    n_enc = len(enc_params)
    noise_keys = jax.random.split(k_noise, n_enc + 1)
    noise_in = noise_std * jax.random.normal(noise_keys[0], (batch, d_in), jnp.float32)
    layer_noise = tuple(
        noise_std * jax.random.normal(noise_keys[l + 1], (batch, w.shape[1]), jnp.float32)
        for l, (w, _) in enumerate(enc_params)
    )

    fwd = jax.jit(ladder_forward)
    clean_out, ladder_loss = fwd(x, enc_params, dec_params, noise_in, layer_noise)
    jax.block_until_ready(clean_out)
    jax.block_until_ready(ladder_loss)

    assert clean_out.shape == (batch, d_out)
    assert ladder_loss.shape == ()

    # Pure-JAX reference check (loose tolerance covers TPU matmul precision).
    ref_out, ref_loss = ladder_forward_ref(x, enc_params, dec_params, noise_in, layer_noise)
    assert bool(jnp.allclose(clean_out, ref_out, rtol=5e-2, atol=5e-2))
    assert bool(jnp.allclose(ladder_loss, ref_loss, rtol=5e-2, atol=5e-2))

    print("KERNEL_OK")
</pallas_src>

<mosaic_0001>
module attributes {stable_mosaic.version = 11 : i64} {
  func.func @kernel(%arg0: i32, %arg1: memref<16x16xf32, #tpu.memory_space<vmem>>, %arg2: memref<16x32xf32, #tpu.memory_space<vmem>>, %arg3: memref<16x32xf32, #tpu.memory_space<vmem>>, %arg4: memref<16x8xf32, #tpu.memory_space<vmem>>, %arg5: memref<16x32xf32, #tpu.memory_space<vmem>>, %arg6: memref<32x32xf32, #tpu.memory_space<vmem>>, %arg7: memref<32x8xf32, #tpu.memory_space<vmem>>, %arg8: memref<1x32xf32, #tpu.memory_space<vmem>>, %arg9: memref<1x32xf32, #tpu.memory_space<vmem>>, %arg10: memref<1x8xf32, #tpu.memory_space<vmem>>, %arg11: memref<5x8xf32, #tpu.memory_space<vmem>>, %arg12: memref<5x32xf32, #tpu.memory_space<vmem>>, %arg13: memref<5x32xf32, #tpu.memory_space<vmem>>, %arg14: memref<5x16xf32, #tpu.memory_space<vmem>>, %arg15: memref<5x8xf32, #tpu.memory_space<vmem>>, %arg16: memref<5x32xf32, #tpu.memory_space<vmem>>, %arg17: memref<5x32xf32, #tpu.memory_space<vmem>>, %arg18: memref<5x16xf32, #tpu.memory_space<vmem>>, %arg19: memref<8x32xf32, #tpu.memory_space<vmem>>, %arg20: memref<32x32xf32, #tpu.memory_space<vmem>>, %arg21: memref<32x16xf32, #tpu.memory_space<vmem>>, %arg22: memref<1x32xf32, #tpu.memory_space<vmem>>, %arg23: memref<1x32xf32, #tpu.memory_space<vmem>>, %arg24: memref<1x16xf32, #tpu.memory_space<vmem>>, %arg25: memref<8x8xf32, #tpu.memory_space<vmem>>, %arg26: memref<1x1xf32, #tpu.memory_space<vmem>>) attributes {dimension_semantics = [#tpu.dimension_semantics<arbitrary>], iteration_bounds = array<i64: 1>, scalar_prefetch = 0 : i64, scratch_operands = 0 : i64, tpu.core_type = #tpu.core_type<tc>, window_params = [{pipeline_mode = #tpu.pipeline_mode<synchronous>, transform_indices = @transform_0, window_bounds = array<i64: 16, 16>}, {pipeline_mode = #tpu.pipeline_mode<synchronous>, transform_indices = @transform_1, window_bounds = array<i64: 16, 32>}, {pipeline_mode = #tpu.pipeline_mode<synchronous>, transform_indices = @transform_2, window_bounds = array<i64: 16, 32>}, {pipeline_mode = #tpu.pipeline_mode<synchronous>, transform_indices = @transform_3, window_bounds = array<i64: 16, 8>}, {pipeline_mode = #tpu.pipeline_mode<synchronous>, transform_indices = @transform_4, window_bounds = array<i64: 16, 32>}, {pipeline_mode = #tpu.pipeline_mode<synchronous>, transform_indices = @transform_5, window_bounds = array<i64: 32, 32>}, {pipeline_mode = #tpu.pipeline_mode<synchronous>, transform_indices = @transform_6, window_bounds = array<i64: 32, 8>}, {pipeline_mode = #tpu.pipeline_mode<synchronous>, transform_indices = @transform_7, window_bounds = array<i64: 1, 32>}, {pipeline_mode = #tpu.pipeline_mode<synchronous>, transform_indices = @transform_8, window_bounds = array<i64: 1, 32>}, {pipeline_mode = #tpu.pipeline_mode<synchronous>, transform_indices = @transform_9, window_bounds = array<i64: 1, 8>}, {pipeline_mode = #tpu.pipeline_mode<synchronous>, transform_indices = @transform_10, window_bounds = array<i64: 5, 8>}, {pipeline_mode = #tpu.pipeline_mode<synchronous>, transform_indices = @transform_11, window_bounds = array<i64: 5, 32>}, {pipeline_mode = #tpu.pipeline_mode<synchronous>, transform_indices = @transform_12, window_bounds = array<i64: 5, 32>}, {pipeline_mode = #tpu.pipeline_mode<synchronous>, transform_indices = @transform_13, window_bounds = array<i64: 5, 16>}, {pipeline_mode = #tpu.pipeline_mode<synchronous>, transform_indices = @transform_14, window_bounds = array<i64: 5, 8>}, {pipeline_mode = #tpu.pipeline_mode<synchronous>, transform_indices = @transform_15, window_bounds = array<i64: 5, 32>}, {pipeline_mode = #tpu.pipeline_mode<synchronous>, transform_indices = @transform_16, window_bounds = array<i64: 5, 32>}, {pipeline_mode = #tpu.pipeline_mode<synchronous>, transform_indices = @transform_17, window_bounds = array<i64: 5, 16>}, {pipeline_mode = #tpu.pipeline_mode<synchronous>, transform_indices = @transform_18, window_bounds = array<i64: 8, 32>}, {pipeline_mode = #tpu.pipeline_mode<synchronous>, transform_indices = @transform_19, window_bounds = array<i64: 32, 32>}, {pipeline_mode = #tpu.pipeline_mode<synchronous>, transform_indices = @transform_20, window_bounds = array<i64: 32, 16>}, {pipeline_mode = #tpu.pipeline_mode<synchronous>, transform_indices = @transform_21, window_bounds = array<i64: 1, 32>}, {pipeline_mode = #tpu.pipeline_mode<synchronous>, transform_indices = @transform_22, window_bounds = array<i64: 1, 32>}, {pipeline_mode = #tpu.pipeline_mode<synchronous>, transform_indices = @transform_23, window_bounds = array<i64: 1, 16>}, {pipeline_mode = #tpu.pipeline_mode<synchronous>, transform_indices = @transform_24, window_bounds = array<i64: 8, 8>}, {pipeline_mode = #tpu.pipeline_mode<synchronous>, transform_indices = @transform_25, window_bounds = array<i64: 1, 1>}]} {
    %c0 = arith.constant 0 : index
    %c0_0 = arith.constant 0 : index
    %0 = vector.load %arg1[%c0, %c0_0] : memref<16x16xf32, #tpu.memory_space<vmem>>, vector<16x16xf32>
    %c0_1 = arith.constant 0 : index
    %c0_2 = arith.constant 0 : index
    %1 = vector.load %arg5[%c0_1, %c0_2] : memref<16x32xf32, #tpu.memory_space<vmem>>, vector<16x32xf32>
    %cst = arith.constant dense<0.000000e+00> : vector<16x32xf32>
    %2 = tpu.matmul %0, %1, %cst {dimension_numbers = #tpu.dot_dimension_numbers<[1], [0], [0], [1], [0, 0, 1, 1], [], []>} : vector<16x16xf32>, vector<16x32xf32>, vector<16x32xf32> -> vector<16x32xf32>
    %c0_3 = arith.constant 0 : index
    %c0_4 = arith.constant 0 : index
    %3 = vector.load %arg8[%c0_3, %c0_4] : memref<1x32xf32, #tpu.memory_space<vmem>>, vector<1x32xf32>
    %4 = vector.broadcast %3 : vector<1x32xf32> to vector<16x32xf32>
    %5 = arith.addf %2, %4 : vector<16x32xf32>
    %c0_5 = arith.constant 0 : index
    %c0_6 = arith.constant 0 : index
    %6 = vector.load %arg2[%c0_5, %c0_6] : memref<16x32xf32, #tpu.memory_space<vmem>>, vector<16x32xf32>
    %7 = arith.addf %5, %6 : vector<16x32xf32>
    %cst_7 = arith.constant 0.000000e+00 : f32
    %8 = vector.broadcast %cst_7 : f32 to vector<16x32xf32>
    %9 = arith.maximumf %7, %8 : vector<16x32xf32>
    %c0_8 = arith.constant 0 : index
    %c0_9 = arith.constant 0 : index
    %10 = vector.load %arg6[%c0_8, %c0_9] : memref<32x32xf32, #tpu.memory_space<vmem>>, vector<32x32xf32>
    %cst_10 = arith.constant dense<0.000000e+00> : vector<16x32xf32>
    %11 = tpu.matmul %9, %10, %cst_10 {dimension_numbers = #tpu.dot_dimension_numbers<[1], [0], [0], [1], [0, 0, 1, 1], [], []>} : vector<16x32xf32>, vector<32x32xf32>, vector<16x32xf32> -> vector<16x32xf32>
    %c0_11 = arith.constant 0 : index
    %c0_12 = arith.constant 0 : index
    %12 = vector.load %arg9[%c0_11, %c0_12] : memref<1x32xf32, #tpu.memory_space<vmem>>, vector<1x32xf32>
    %13 = vector.broadcast %12 : vector<1x32xf32> to vector<16x32xf32>
    %14 = arith.addf %11, %13 : vector<16x32xf32>
    %c0_13 = arith.constant 0 : index
    %c0_14 = arith.constant 0 : index
    %15 = vector.load %arg3[%c0_13, %c0_14] : memref<16x32xf32, #tpu.memory_space<vmem>>, vector<16x32xf32>
    %16 = arith.addf %14, %15 : vector<16x32xf32>
    %cst_15 = arith.constant 0.000000e+00 : f32
    %17 = vector.broadcast %cst_15 : f32 to vector<16x32xf32>
    %18 = arith.maximumf %16, %17 : vector<16x32xf32>
    %c0_16 = arith.constant 0 : index
    %c0_17 = arith.constant 0 : index
    %19 = vector.load %arg7[%c0_16, %c0_17] : memref<32x8xf32, #tpu.memory_space<vmem>>, vector<32x8xf32>
    %cst_18 = arith.constant dense<0.000000e+00> : vector<16x8xf32>
    %20 = tpu.matmul %18, %19, %cst_18 {dimension_numbers = #tpu.dot_dimension_numbers<[1], [0], [0], [1], [0, 0, 1, 1], [], []>} : vector<16x32xf32>, vector<32x8xf32>, vector<16x8xf32> -> vector<16x8xf32>
    %c0_19 = arith.constant 0 : index
    %c0_20 = arith.constant 0 : index
    %21 = vector.load %arg10[%c0_19, %c0_20] : memref<1x8xf32, #tpu.memory_space<vmem>>, vector<1x8xf32>
    %22 = vector.broadcast %21 : vector<1x8xf32> to vector<16x8xf32>
    %23 = arith.addf %20, %22 : vector<16x8xf32>
    %c0_21 = arith.constant 0 : index
    %c0_22 = arith.constant 0 : index
    %24 = vector.load %arg4[%c0_21, %c0_22] : memref<16x8xf32, #tpu.memory_space<vmem>>, vector<16x8xf32>
    %25 = arith.addf %23, %24 : vector<16x8xf32>
    %26 = vector.extract_strided_slice %0 {offsets = [0, 0], sizes = [8, 16], strides = [1, 1]} : vector<16x16xf32> to vector<8x16xf32>
    %27 = vector.extract_strided_slice %7 {offsets = [0, 0], sizes = [8, 32], strides = [1, 1]} : vector<16x32xf32> to vector<8x32xf32>
    %28 = vector.extract_strided_slice %16 {offsets = [0, 0], sizes = [8, 32], strides = [1, 1]} : vector<16x32xf32> to vector<8x32xf32>
    %29 = vector.extract_strided_slice %25 {offsets = [0, 0], sizes = [8, 8], strides = [1, 1]} : vector<16x8xf32> to vector<8x8xf32>
    %30 = vector.extract_strided_slice %0 {offsets = [8, 0], sizes = [8, 16], strides = [1, 1]} : vector<16x16xf32> to vector<8x16xf32>
    %31 = vector.extract_strided_slice %7 {offsets = [8, 0], sizes = [8, 32], strides = [1, 1]} : vector<16x32xf32> to vector<8x32xf32>
    %32 = vector.extract_strided_slice %16 {offsets = [8, 0], sizes = [8, 32], strides = [1, 1]} : vector<16x32xf32> to vector<8x32xf32>
    %33 = vector.extract_strided_slice %25 {offsets = [8, 0], sizes = [8, 8], strides = [1, 1]} : vector<16x8xf32> to vector<8x8xf32>
    %c0_23 = arith.constant 0 : index
    %c0_24 = arith.constant 0 : index
    %34 = vector.load %arg11[%c0_23, %c0_24] : memref<5x8xf32, #tpu.memory_space<vmem>>, vector<5x8xf32>
    %c0_25 = arith.constant 0 : index
    %c0_26 = arith.constant 0 : index
    %35 = vector.load %arg15[%c0_25, %c0_26] : memref<5x8xf32, #tpu.memory_space<vmem>>, vector<5x8xf32>
    %36 = vector.extract_strided_slice %34 {offsets = [0, 0], sizes = [1, 8], strides = [1, 1]} : vector<5x8xf32> to vector<1x8xf32>
    %37 = vector.extract_strided_slice %34 {offsets = [1, 0], sizes = [1, 8], strides = [1, 1]} : vector<5x8xf32> to vector<1x8xf32>
    %38 = vector.extract_strided_slice %34 {offsets = [2, 0], sizes = [1, 8], strides = [1, 1]} : vector<5x8xf32> to vector<1x8xf32>
    %39 = vector.extract_strided_slice %34 {offsets = [3, 0], sizes = [1, 8], strides = [1, 1]} : vector<5x8xf32> to vector<1x8xf32>
    %40 = vector.extract_strided_slice %34 {offsets = [4, 0], sizes = [1, 8], strides = [1, 1]} : vector<5x8xf32> to vector<1x8xf32>
    %41 = vector.extract_strided_slice %35 {offsets = [0, 0], sizes = [1, 8], strides = [1, 1]} : vector<5x8xf32> to vector<1x8xf32>
    %42 = vector.extract_strided_slice %35 {offsets = [1, 0], sizes = [1, 8], strides = [1, 1]} : vector<5x8xf32> to vector<1x8xf32>
    %43 = vector.extract_strided_slice %35 {offsets = [2, 0], sizes = [1, 8], strides = [1, 1]} : vector<5x8xf32> to vector<1x8xf32>
    %44 = vector.extract_strided_slice %35 {offsets = [3, 0], sizes = [1, 8], strides = [1, 1]} : vector<5x8xf32> to vector<1x8xf32>
    %45 = vector.extract_strided_slice %35 {offsets = [4, 0], sizes = [1, 8], strides = [1, 1]} : vector<5x8xf32> to vector<1x8xf32>
    %46 = vector.broadcast %37 : vector<1x8xf32> to vector<8x8xf32>
    %47 = arith.mulf %46, %33 : vector<8x8xf32>
    %48 = vector.broadcast %38 : vector<1x8xf32> to vector<8x8xf32>
    %49 = arith.addf %47, %48 : vector<8x8xf32>
    %50 = arith.negf %49 : vector<8x8xf32>
    %51 = math.exp %50 : vector<8x8xf32>
    %cst_27 = arith.constant 1.000000e+00 : f32
    %52 = vector.broadcast %cst_27 : f32 to vector<8x8xf32>
    %53 = arith.addf %52, %51 : vector<8x8xf32>
    %54 = arith.divf %52, %53 : vector<8x8xf32>
    %55 = vector.broadcast %36 : vector<1x8xf32> to vector<8x8xf32>
    %56 = arith.mulf %55, %54 : vector<8x8xf32>
    %57 = vector.broadcast %39 : vector<1x8xf32> to vector<8x8xf32>
    %58 = arith.mulf %57, %33 : vector<8x8xf32>
    %59 = arith.addf %56, %58 : vector<8x8xf32>
    %60 = vector.broadcast %40 : vector<1x8xf32> to vector<8x8xf32>
    %61 = arith.addf %59, %60 : vector<8x8xf32>
    %62 = vector.broadcast %42 : vector<1x8xf32> to vector<8x8xf32>
    %63 = arith.mulf %62, %33 : vector<8x8xf32>
    %64 = vector.broadcast %43 : vector<1x8xf32> to vector<8x8xf32>
    %65 = arith.addf %63, %64 : vector<8x8xf32>
    %66 = arith.negf %65 : vector<8x8xf32>
    %67 = math.exp %66 : vector<8x8xf32>
    %cst_28 = arith.constant 1.000000e+00 : f32
    %68 = vector.broadcast %cst_28 : f32 to vector<8x8xf32>
    %69 = arith.addf %68, %67 : vector<8x8xf32>
    %70 = arith.divf %68, %69 : vector<8x8xf32>
    %71 = vector.broadcast %41 : vector<1x8xf32> to vector<8x8xf32>
    %72 = arith.mulf %71, %70 : vector<8x8xf32>
    %73 = vector.broadcast %44 : vector<1x8xf32> to vector<8x8xf32>
    %74 = arith.mulf %73, %33 : vector<8x8xf32>
    %75 = arith.addf %72, %74 : vector<8x8xf32>
    %76 = vector.broadcast %45 : vector<1x8xf32> to vector<8x8xf32>
    %77 = arith.addf %75, %76 : vector<8x8xf32>
    %78 = arith.subf %33, %61 : vector<8x8xf32>
    %79 = arith.mulf %78, %77 : vector<8x8xf32>
    %80 = arith.addf %79, %61 : vector<8x8xf32>
    %c0_29 = arith.constant 0 : index
    %c0_30 = arith.constant 0 : index
    %81 = vector.load %arg19[%c0_29, %c0_30] : memref<8x32xf32, #tpu.memory_space<vmem>>, vector<8x32xf32>
    %cst_31 = arith.constant dense<0.000000e+00> : vector<8x32xf32>
    %82 = tpu.matmul %80, %81, %cst_31 {dimension_numbers = #tpu.dot_dimension_numbers<[1], [0], [0], [1], [0, 0, 1, 1], [], []>} : vector<8x8xf32>, vector<8x32xf32>, vector<8x32xf32> -> vector<8x32xf32>
    %c0_32 = arith.constant 0 : index
    %c0_33 = arith.constant 0 : index
    %83 = vector.load %arg22[%c0_32, %c0_33] : memref<1x32xf32, #tpu.memory_space<vmem>>, vector<1x32xf32>
    %84 = vector.broadcast %83 : vector<1x32xf32> to vector<8x32xf32>
    %85 = arith.addf %82, %84 : vector<8x32xf32>
    %c0_34 = arith.constant 0 : index
    %c0_35 = arith.constant 0 : index
    %86 = vector.load %arg12[%c0_34, %c0_35] : memref<5x32xf32, #tpu.memory_space<vmem>>, vector<5x32xf32>
    %c0_36 = arith.constant 0 : index
    %c0_37 = arith.constant 0 : index
    %87 = vector.load %arg16[%c0_36, %c0_37] : memref<5x32xf32, #tpu.memory_space<vmem>>, vector<5x32xf32>
    %88 = vector.extract_strided_slice %86 {offsets = [0, 0], sizes = [1, 32], strides = [1, 1]} : vector<5x32xf32> to vector<1x32xf32>
    %89 = vector.extract_strided_slice %86 {offsets = [1, 0], sizes = [1, 32], strides = [1, 1]} : vector<5x32xf32> to vector<1x32xf32>
    %90 = vector.extract_strided_slice %86 {offsets = [2, 0], sizes = [1, 32], strides = [1, 1]} : vector<5x32xf32> to vector<1x32xf32>
    %91 = vector.extract_strided_slice %86 {offsets = [3, 0], sizes = [1, 32], strides = [1, 1]} : vector<5x32xf32> to vector<1x32xf32>
    %92 = vector.extract_strided_slice %86 {offsets = [4, 0], sizes = [1, 32], strides = [1, 1]} : vector<5x32xf32> to vector<1x32xf32>
    %93 = vector.extract_strided_slice %87 {offsets = [0, 0], sizes = [1, 32], strides = [1, 1]} : vector<5x32xf32> to vector<1x32xf32>
    %94 = vector.extract_strided_slice %87 {offsets = [1, 0], sizes = [1, 32], strides = [1, 1]} : vector<5x32xf32> to vector<1x32xf32>
    %95 = vector.extract_strided_slice %87 {offsets = [2, 0], sizes = [1, 32], strides = [1, 1]} : vector<5x32xf32> to vector<1x32xf32>
    %96 = vector.extract_strided_slice %87 {offsets = [3, 0], sizes = [1, 32], strides = [1, 1]} : vector<5x32xf32> to vector<1x32xf32>
    %97 = vector.extract_strided_slice %87 {offsets = [4, 0], sizes = [1, 32], strides = [1, 1]} : vector<5x32xf32> to vector<1x32xf32>
    %98 = vector.broadcast %89 : vector<1x32xf32> to vector<8x32xf32>
    %99 = arith.mulf %98, %85 : vector<8x32xf32>
    %100 = vector.broadcast %90 : vector<1x32xf32> to vector<8x32xf32>
    %101 = arith.addf %99, %100 : vector<8x32xf32>
    %102 = arith.negf %101 : vector<8x32xf32>
    %103 = math.exp %102 : vector<8x32xf32>
    %cst_38 = arith.constant 1.000000e+00 : f32
    %104 = vector.broadcast %cst_38 : f32 to vector<8x32xf32>
    %105 = arith.addf %104, %103 : vector<8x32xf32>
    %106 = arith.divf %104, %105 : vector<8x32xf32>
    %107 = vector.broadcast %88 : vector<1x32xf32> to vector<8x32xf32>
    %108 = arith.mulf %107, %106 : vector<8x32xf32>
    %109 = vector.broadcast %91 : vector<1x32xf32> to vector<8x32xf32>
    %110 = arith.mulf %109, %85 : vector<8x32xf32>
    %111 = arith.addf %108, %110 : vector<8x32xf32>
    %112 = vector.broadcast %92 : vector<1x32xf32> to vector<8x32xf32>
    %113 = arith.addf %111, %112 : vector<8x32xf32>
    %114 = vector.broadcast %94 : vector<1x32xf32> to vector<8x32xf32>
    %115 = arith.mulf %114, %85 : vector<8x32xf32>
    %116 = vector.broadcast %95 : vector<1x32xf32> to vector<8x32xf32>
    %117 = arith.addf %115, %116 : vector<8x32xf32>
    %118 = arith.negf %117 : vector<8x32xf32>
    %119 = math.exp %118 : vector<8x32xf32>
    %cst_39 = arith.constant 1.000000e+00 : f32
    %120 = vector.broadcast %cst_39 : f32 to vector<8x32xf32>
    %121 = arith.addf %120, %119 : vector<8x32xf32>
    %122 = arith.divf %120, %121 : vector<8x32xf32>
    %123 = vector.broadcast %93 : vector<1x32xf32> to vector<8x32xf32>
    %124 = arith.mulf %123, %122 : vector<8x32xf32>
    %125 = vector.broadcast %96 : vector<1x32xf32> to vector<8x32xf32>
    %126 = arith.mulf %125, %85 : vector<8x32xf32>
    %127 = arith.addf %124, %126 : vector<8x32xf32>
    %128 = vector.broadcast %97 : vector<1x32xf32> to vector<8x32xf32>
    %129 = arith.addf %127, %128 : vector<8x32xf32>
    %130 = arith.subf %32, %113 : vector<8x32xf32>
    %131 = arith.mulf %130, %129 : vector<8x32xf32>
    %132 = arith.addf %131, %113 : vector<8x32xf32>
    %c0_40 = arith.constant 0 : index
    %c0_41 = arith.constant 0 : index
    %133 = vector.load %arg20[%c0_40, %c0_41] : memref<32x32xf32, #tpu.memory_space<vmem>>, vector<32x32xf32>
    %cst_42 = arith.constant dense<0.000000e+00> : vector<8x32xf32>
    %134 = tpu.matmul %132, %133, %cst_42 {dimension_numbers = #tpu.dot_dimension_numbers<[1], [0], [0], [1], [0, 0, 1, 1], [], []>} : vector<8x32xf32>, vector<32x32xf32>, vector<8x32xf32> -> vector<8x32xf32>
    %c0_43 = arith.constant 0 : index
    %c0_44 = arith.constant 0 : index
    %135 = vector.load %arg23[%c0_43, %c0_44] : memref<1x32xf32, #tpu.memory_space<vmem>>, vector<1x32xf32>
    %136 = vector.broadcast %135 : vector<1x32xf32> to vector<8x32xf32>
    %137 = arith.addf %134, %136 : vector<8x32xf32>
    %c0_45 = arith.constant 0 : index
    %c0_46 = arith.constant 0 : index
    %138 = vector.load %arg13[%c0_45, %c0_46] : memref<5x32xf32, #tpu.memory_space<vmem>>, vector<5x32xf32>
    %c0_47 = arith.constant 0 : index
    %c0_48 = arith.constant 0 : index
    %139 = vector.load %arg17[%c0_47, %c0_48] : memref<5x32xf32, #tpu.memory_space<vmem>>, vector<5x32xf32>
    %140 = vector.extract_strided_slice %138 {offsets = [0, 0], sizes = [1, 32], strides = [1, 1]} : vector<5x32xf32> to vector<1x32xf32>
    %141 = vector.extract_strided_slice %138 {offsets = [1, 0], sizes = [1, 32], strides = [1, 1]} : vector<5x32xf32> to vector<1x32xf32>
    %142 = vector.extract_strided_slice %138 {offsets = [2, 0], sizes = [1, 32], strides = [1, 1]} : vector<5x32xf32> to vector<1x32xf32>
    %143 = vector.extract_strided_slice %138 {offsets = [3, 0], sizes = [1, 32], strides = [1, 1]} : vector<5x32xf32> to vector<1x32xf32>
    %144 = vector.extract_strided_slice %138 {offsets = [4, 0], sizes = [1, 32], strides = [1, 1]} : vector<5x32xf32> to vector<1x32xf32>
    %145 = vector.extract_strided_slice %139 {offsets = [0, 0], sizes = [1, 32], strides = [1, 1]} : vector<5x32xf32> to vector<1x32xf32>
    %146 = vector.extract_strided_slice %139 {offsets = [1, 0], sizes = [1, 32], strides = [1, 1]} : vector<5x32xf32> to vector<1x32xf32>
    %147 = vector.extract_strided_slice %139 {offsets = [2, 0], sizes = [1, 32], strides = [1, 1]} : vector<5x32xf32> to vector<1x32xf32>
    %148 = vector.extract_strided_slice %139 {offsets = [3, 0], sizes = [1, 32], strides = [1, 1]} : vector<5x32xf32> to vector<1x32xf32>
    %149 = vector.extract_strided_slice %139 {offsets = [4, 0], sizes = [1, 32], strides = [1, 1]} : vector<5x32xf32> to vector<1x32xf32>
    %150 = vector.broadcast %141 : vector<1x32xf32> to vector<8x32xf32>
    %151 = arith.mulf %150, %137 : vector<8x32xf32>
    %152 = vector.broadcast %142 : vector<1x32xf32> to vector<8x32xf32>
    %153 = arith.addf %151, %152 : vector<8x32xf32>
    %154 = arith.negf %153 : vector<8x32xf32>
    %155 = math.exp %154 : vector<8x32xf32>
    %cst_49 = arith.constant 1.000000e+00 : f32
    %156 = vector.broadcast %cst_49 : f32 to vector<8x32xf32>
    %157 = arith.addf %156, %155 : vector<8x32xf32>
    %158 = arith.divf %156, %157 : vector<8x32xf32>
    %159 = vector.broadcast %140 : vector<1x32xf32> to vector<8x32xf32>
    %160 = arith.mulf %159, %158 : vector<8x32xf32>
    %161 = vector.broadcast %143 : vector<1x32xf32> to vector<8x32xf32>
    %162 = arith.mulf %161, %137 : vector<8x32xf32>
    %163 = arith.addf %160, %162 : vector<8x32xf32>
    %164 = vector.broadcast %144 : vector<1x32xf32> to vector<8x32xf32>
    %165 = arith.addf %163, %164 : vector<8x32xf32>
    %166 = vector.broadcast %146 : vector<1x32xf32> to vector<8x32xf32>
    %167 = arith.mulf %166, %137 : vector<8x32xf32>
    %168 = vector.broadcast %147 : vector<1x32xf32> to vector<8x32xf32>
    %169 = arith.addf %167, %168 : vector<8x32xf32>
    %170 = arith.negf %169 : vector<8x32xf32>
    %171 = math.exp %170 : vector<8x32xf32>
    %cst_50 = arith.constant 1.000000e+00 : f32
    %172 = vector.broadcast %cst_50 : f32 to vector<8x32xf32>
    %173 = arith.addf %172, %171 : vector<8x32xf32>
    %174 = arith.divf %172, %173 : vector<8x32xf32>
    %175 = vector.broadcast %145 : vector<1x32xf32> to vector<8x32xf32>
    %176 = arith.mulf %175, %174 : vector<8x32xf32>
    %177 = vector.broadcast %148 : vector<1x32xf32> to vector<8x32xf32>
    %178 = arith.mulf %177, %137 : vector<8x32xf32>
    %179 = arith.addf %176, %178 : vector<8x32xf32>
    %180 = vector.broadcast %149 : vector<1x32xf32> to vector<8x32xf32>
    %181 = arith.addf %179, %180 : vector<8x32xf32>
    %182 = arith.subf %31, %165 : vector<8x32xf32>
    %183 = arith.mulf %182, %181 : vector<8x32xf32>
    %184 = arith.addf %183, %165 : vector<8x32xf32>
    %c0_51 = arith.constant 0 : index
    %c0_52 = arith.constant 0 : index
    %185 = vector.load %arg21[%c0_51, %c0_52] : memref<32x16xf32, #tpu.memory_space<vmem>>, vector<32x16xf32>
    %cst_53 = arith.constant dense<0.000000e+00> : vector<8x16xf32>
    %186 = tpu.matmul %184, %185, %cst_53 {dimension_numbers = #tpu.dot_dimension_numbers<[1], [0], [0], [1], [0, 0, 1, 1], [], []>} : vector<8x32xf32>, vector<32x16xf32>, vector<8x16xf32> -> vector<8x16xf32>
    %c0_54 = arith.constant 0 : index
    %c0_55 = arith.constant 0 : index
    %187 = vector.load %arg24[%c0_54, %c0_55] : memref<1x16xf32, #tpu.memory_space<vmem>>, vector<1x16xf32>
    %188 = vector.broadcast %187 : vector<1x16xf32> to vector<8x16xf32>
    %189 = arith.addf %186, %188 : vector<8x16xf32>
    %c0_56 = arith.constant 0 : index
    %c0_57 = arith.constant 0 : index
    %190 = vector.load %arg14[%c0_56, %c0_57] : memref<5x16xf32, #tpu.memory_space<vmem>>, vector<5x16xf32>
    %c0_58 = arith.constant 0 : index
    %c0_59 = arith.constant 0 : index
    %191 = vector.load %arg18[%c0_58, %c0_59] : memref<5x16xf32, #tpu.memory_space<vmem>>, vector<5x16xf32>
    %192 = vector.extract_strided_slice %190 {offsets = [0, 0], sizes = [1, 16], strides = [1, 1]} : vector<5x16xf32> to vector<1x16xf32>
    %193 = vector.extract_strided_slice %190 {offsets = [1, 0], sizes = [1, 16], strides = [1, 1]} : vector<5x16xf32> to vector<1x16xf32>
    %194 = vector.extract_strided_slice %190 {offsets = [2, 0], sizes = [1, 16], strides = [1, 1]} : vector<5x16xf32> to vector<1x16xf32>
    %195 = vector.extract_strided_slice %190 {offsets = [3, 0], sizes = [1, 16], strides = [1, 1]} : vector<5x16xf32> to vector<1x16xf32>
    %196 = vector.extract_strided_slice %190 {offsets = [4, 0], sizes = [1, 16], strides = [1, 1]} : vector<5x16xf32> to vector<1x16xf32>
    %197 = vector.extract_strided_slice %191 {offsets = [0, 0], sizes = [1, 16], strides = [1, 1]} : vector<5x16xf32> to vector<1x16xf32>
    %198 = vector.extract_strided_slice %191 {offsets = [1, 0], sizes = [1, 16], strides = [1, 1]} : vector<5x16xf32> to vector<1x16xf32>
    %199 = vector.extract_strided_slice %191 {offsets = [2, 0], sizes = [1, 16], strides = [1, 1]} : vector<5x16xf32> to vector<1x16xf32>
    %200 = vector.extract_strided_slice %191 {offsets = [3, 0], sizes = [1, 16], strides = [1, 1]} : vector<5x16xf32> to vector<1x16xf32>
    %201 = vector.extract_strided_slice %191 {offsets = [4, 0], sizes = [1, 16], strides = [1, 1]} : vector<5x16xf32> to vector<1x16xf32>
    %202 = vector.broadcast %193 : vector<1x16xf32> to vector<8x16xf32>
    %203 = arith.mulf %202, %189 : vector<8x16xf32>
    %204 = vector.broadcast %194 : vector<1x16xf32> to vector<8x16xf32>
    %205 = arith.addf %203, %204 : vector<8x16xf32>
    %206 = arith.negf %205 : vector<8x16xf32>
    %207 = math.exp %206 : vector<8x16xf32>
    %cst_60 = arith.constant 1.000000e+00 : f32
    %208 = vector.broadcast %cst_60 : f32 to vector<8x16xf32>
    %209 = arith.addf %208, %207 : vector<8x16xf32>
    %210 = arith.divf %208, %209 : vector<8x16xf32>
    %211 = vector.broadcast %192 : vector<1x16xf32> to vector<8x16xf32>
    %212 = arith.mulf %211, %210 : vector<8x16xf32>
    %213 = vector.broadcast %195 : vector<1x16xf32> to vector<8x16xf32>
    %214 = arith.mulf %213, %189 : vector<8x16xf32>
    %215 = arith.addf %212, %214 : vector<8x16xf32>
    %216 = vector.broadcast %196 : vector<1x16xf32> to vector<8x16xf32>
    %217 = arith.addf %215, %216 : vector<8x16xf32>
    %218 = vector.broadcast %198 : vector<1x16xf32> to vector<8x16xf32>
    %219 = arith.mulf %218, %189 : vector<8x16xf32>
    %220 = vector.broadcast %199 : vector<1x16xf32> to vector<8x16xf32>
    %221 = arith.addf %219, %220 : vector<8x16xf32>
    %222 = arith.negf %221 : vector<8x16xf32>
    %223 = math.exp %222 : vector<8x16xf32>
    %cst_61 = arith.constant 1.000000e+00 : f32
    %224 = vector.broadcast %cst_61 : f32 to vector<8x16xf32>
    %225 = arith.addf %224, %223 : vector<8x16xf32>
    %226 = arith.divf %224, %225 : vector<8x16xf32>
    %227 = vector.broadcast %197 : vector<1x16xf32> to vector<8x16xf32>
    %228 = arith.mulf %227, %226 : vector<8x16xf32>
    %229 = vector.broadcast %200 : vector<1x16xf32> to vector<8x16xf32>
    %230 = arith.mulf %229, %189 : vector<8x16xf32>
    %231 = arith.addf %228, %230 : vector<8x16xf32>
    %232 = vector.broadcast %201 : vector<1x16xf32> to vector<8x16xf32>
    %233 = arith.addf %231, %232 : vector<8x16xf32>
    %234 = arith.subf %30, %217 : vector<8x16xf32>
    %235 = arith.mulf %234, %233 : vector<8x16xf32>
    %236 = arith.addf %235, %217 : vector<8x16xf32>
    %237 = arith.subf %26, %236 : vector<8x16xf32>
    %238 = arith.mulf %237, %237 : vector<8x16xf32>
    %239 = vector.shape_cast %238 : vector<8x16xf32> to vector<1x8x16xf32>
    %cst_62 = arith.constant dense<0.000000e+00> : vector<1xf32>
    %240 = vector.multi_reduction <add>, %239, %cst_62 [1, 2] : vector<1x8x16xf32> to vector<1xf32>
    %241 = vector.shape_cast %240 : vector<1xf32> to vector<1x1x1xf32>
    %242 = vector.extract %241[0, 0, 0] : f32 from vector<1x1x1xf32>
    %cst_63 = arith.constant 1.280000e+02 : f32
    %243 = arith.divf %242, %cst_63 : f32
    %cst_64 = arith.constant 0.000000e+00 : f32
    %244 = arith.addf %cst_64, %243 : f32
    %245 = arith.subf %27, %184 : vector<8x32xf32>
    %246 = arith.mulf %245, %245 : vector<8x32xf32>
    %247 = vector.shape_cast %246 : vector<8x32xf32> to vector<1x8x32xf32>
    %cst_65 = arith.constant dense<0.000000e+00> : vector<1xf32>
    %248 = vector.multi_reduction <add>, %247, %cst_65 [1, 2] : vector<1x8x32xf32> to vector<1xf32>
    %249 = vector.shape_cast %248 : vector<1xf32> to vector<1x1x1xf32>
    %250 = vector.extract %249[0, 0, 0] : f32 from vector<1x1x1xf32>
    %cst_66 = arith.constant 2.560000e+02 : f32
    %251 = arith.divf %250, %cst_66 : f32
    %252 = arith.addf %244, %251 : f32
    %253 = arith.subf %28, %132 : vector<8x32xf32>
    %254 = arith.mulf %253, %253 : vector<8x32xf32>
    %255 = vector.shape_cast %254 : vector<8x32xf32> to vector<1x8x32xf32>
    %cst_67 = arith.constant dense<0.000000e+00> : vector<1xf32>
    %256 = vector.multi_reduction <add>, %255, %cst_67 [1, 2] : vector<1x8x32xf32> to vector<1xf32>
    %257 = vector.shape_cast %256 : vector<1xf32> to vector<1x1x1xf32>
    %258 = vector.extract %257[0, 0, 0] : f32 from vector<1x1x1xf32>
    %cst_68 = arith.constant 2.560000e+02 : f32
    %259 = arith.divf %258, %cst_68 : f32
    %260 = arith.addf %252, %259 : f32
    %261 = arith.subf %29, %80 : vector<8x8xf32>
    %262 = arith.mulf %261, %261 : vector<8x8xf32>
    %263 = vector.shape_cast %262 : vector<8x8xf32> to vector<1x8x8xf32>
    %cst_69 = arith.constant dense<0.000000e+00> : vector<1xf32>
    %264 = vector.multi_reduction <add>, %263, %cst_69 [1, 2] : vector<1x8x8xf32> to vector<1xf32>
    %265 = vector.shape_cast %264 : vector<1xf32> to vector<1x1x1xf32>
    %266 = vector.extract %265[0, 0, 0] : f32 from vector<1x1x1xf32>
    %cst_70 = arith.constant 6.400000e+01 : f32
    %267 = arith.divf %266, %cst_70 : f32
    %268 = arith.addf %260, %267 : f32
    %c0_71 = arith.constant 0 : index
    %c0_72 = arith.constant 0 : index
    %269 = vector.load %arg25[%c0_71, %c0_72] : memref<8x8xf32, #tpu.memory_space<vmem>>, vector<8x8xf32>
    tpu.vector_store %arg25[%c0_71, %c0_72], %29 {strides = array<i32>} : memref<8x8xf32, #tpu.memory_space<vmem>>, vector<8x8xf32>,
    %270 = vector.broadcast %268 : f32 to vector<1x1xf32>
    %c0_73 = arith.constant 0 : index
    %c0_74 = arith.constant 0 : index
    %271 = vector.load %arg26[%c0_73, %c0_74] : memref<1x1xf32, #tpu.memory_space<vmem>>, vector<1x1xf32>
    tpu.vector_store %arg26[%c0_73, %c0_74], %270 {strides = array<i32>} : memref<1x1xf32, #tpu.memory_space<vmem>>, vector<1x1xf32>,
    return
  }
  func.func @transform_0(%arg0: i32) -> (i32, i32) {
    %c0_i32 = arith.constant 0 : i32
    %c0_i32_0 = arith.constant 0 : i32
    %c0_i32_1 = arith.constant 0 : i32
    return %c0_i32, %c0_i32_0 : i32, i32
  }
  func.func @transform_1(%arg0: i32) -> (i32, i32) {
    %c0_i32 = arith.constant 0 : i32
    %c0_i32_0 = arith.constant 0 : i32
    %c0_i32_1 = arith.constant 0 : i32
    return %c0_i32, %c0_i32_0 : i32, i32
  }
  func.func @transform_2(%arg0: i32) -> (i32, i32) {
    %c0_i32 = arith.constant 0 : i32
    %c0_i32_0 = arith.constant 0 : i32
    %c0_i32_1 = arith.constant 0 : i32
    return %c0_i32, %c0_i32_0 : i32, i32
  }
  func.func @transform_3(%arg0: i32) -> (i32, i32) {
    %c0_i32 = arith.constant 0 : i32
    %c0_i32_0 = arith.constant 0 : i32
    %c0_i32_1 = arith.constant 0 : i32
    return %c0_i32, %c0_i32_0 : i32, i32
  }
  func.func @transform_4(%arg0: i32) -> (i32, i32) {
    %c0_i32 = arith.constant 0 : i32
    %c0_i32_0 = arith.constant 0 : i32
    %c0_i32_1 = arith.constant 0 : i32
    return %c0_i32, %c0_i32_0 : i32, i32
  }
  func.func @transform_5(%arg0: i32) -> (i32, i32) {
    %c0_i32 = arith.constant 0 : i32
    %c0_i32_0 = arith.constant 0 : i32
    %c0_i32_1 = arith.constant 0 : i32
    return %c0_i32, %c0_i32_0 : i32, i32
  }
  func.func @transform_6(%arg0: i32) -> (i32, i32) {
    %c0_i32 = arith.constant 0 : i32
    %c0_i32_0 = arith.constant 0 : i32
    %c0_i32_1 = arith.constant 0 : i32
    return %c0_i32, %c0_i32_0 : i32, i32
  }
  func.func @transform_7(%arg0: i32) -> (i32, i32) {
    %c0_i32 = arith.constant 0 : i32
    %c0_i32_0 = arith.constant 0 : i32
    %c0_i32_1 = arith.constant 0 : i32
    return %c0_i32, %c0_i32_0 : i32, i32
  }
  func.func @transform_8(%arg0: i32) -> (i32, i32) {
    %c0_i32 = arith.constant 0 : i32
    %c0_i32_0 = arith.constant 0 : i32
    %c0_i32_1 = arith.constant 0 : i32
    return %c0_i32, %c0_i32_0 : i32, i32
  }
  func.func @transform_9(%arg0: i32) -> (i32, i32) {
    %c0_i32 = arith.constant 0 : i32
    %c0_i32_0 = arith.constant 0 : i32
    %c0_i32_1 = arith.constant 0 : i32
    return %c0_i32, %c0_i32_0 : i32, i32
  }
  func.func @transform_10(%arg0: i32) -> (i32, i32) {
    %c0_i32 = arith.constant 0 : i32
    %c0_i32_0 = arith.constant 0 : i32
    %c0_i32_1 = arith.constant 0 : i32
    return %c0_i32, %c0_i32_0 : i32, i32
  }
  func.func @transform_11(%arg0: i32) -> (i32, i32) {
    %c0_i32 = arith.constant 0 : i32
    %c0_i32_0 = arith.constant 0 : i32
    %c0_i32_1 = arith.constant 0 : i32
    return %c0_i32, %c0_i32_0 : i32, i32
  }
  func.func @transform_12(%arg0: i32) -> (i32, i32) {
    %c0_i32 = arith.constant 0 : i32
    %c0_i32_0 = arith.constant 0 : i32
    %c0_i32_1 = arith.constant 0 : i32
    return %c0_i32, %c0_i32_0 : i32, i32
  }
  func.func @transform_13(%arg0: i32) -> (i32, i32) {
    %c0_i32 = arith.constant 0 : i32
    %c0_i32_0 = arith.constant 0 : i32
    %c0_i32_1 = arith.constant 0 : i32
    return %c0_i32, %c0_i32_0 : i32, i32
  }
  func.func @transform_14(%arg0: i32) -> (i32, i32) {
    %c0_i32 = arith.constant 0 : i32
    %c0_i32_0 = arith.constant 0 : i32
    %c0_i32_1 = arith.constant 0 : i32
    return %c0_i32, %c0_i32_0 : i32, i32
  }
  func.func @transform_15(%arg0: i32) -> (i32, i32) {
    %c0_i32 = arith.constant 0 : i32
    %c0_i32_0 = arith.constant 0 : i32
    %c0_i32_1 = arith.constant 0 : i32
    return %c0_i32, %c0_i32_0 : i32, i32
  }
  func.func @transform_16(%arg0: i32) -> (i32, i32) {
    %c0_i32 = arith.constant 0 : i32
    %c0_i32_0 = arith.constant 0 : i32
    %c0_i32_1 = arith.constant 0 : i32
    return %c0_i32, %c0_i32_0 : i32, i32
  }
  func.func @transform_17(%arg0: i32) -> (i32, i32) {
    %c0_i32 = arith.constant 0 : i32
    %c0_i32_0 = arith.constant 0 : i32
    %c0_i32_1 = arith.constant 0 : i32
    return %c0_i32, %c0_i32_0 : i32, i32
  }
  func.func @transform_18(%arg0: i32) -> (i32, i32) {
    %c0_i32 = arith.constant 0 : i32
    %c0_i32_0 = arith.constant 0 : i32
    %c0_i32_1 = arith.constant 0 : i32
    return %c0_i32, %c0_i32_0 : i32, i32
  }
  func.func @transform_19(%arg0: i32) -> (i32, i32) {
    %c0_i32 = arith.constant 0 : i32
    %c0_i32_0 = arith.constant 0 : i32
    %c0_i32_1 = arith.constant 0 : i32
    return %c0_i32, %c0_i32_0 : i32, i32
  }
  func.func @transform_20(%arg0: i32) -> (i32, i32) {
    %c0_i32 = arith.constant 0 : i32
    %c0_i32_0 = arith.constant 0 : i32
    %c0_i32_1 = arith.constant 0 : i32
    return %c0_i32, %c0_i32_0 : i32, i32
  }
  func.func @transform_21(%arg0: i32) -> (i32, i32) {
    %c0_i32 = arith.constant 0 : i32
    %c0_i32_0 = arith.constant 0 : i32
    %c0_i32_1 = arith.constant 0 : i32
    return %c0_i32, %c0_i32_0 : i32, i32
  }
  func.func @transform_22(%arg0: i32) -> (i32, i32) {
    %c0_i32 = arith.constant 0 : i32
    %c0_i32_0 = arith.constant 0 : i32
    %c0_i32_1 = arith.constant 0 : i32
    return %c0_i32, %c0_i32_0 : i32, i32
  }
  func.func @transform_23(%arg0: i32) -> (i32, i32) {
    %c0_i32 = arith.constant 0 : i32
    %c0_i32_0 = arith.constant 0 : i32
    %c0_i32_1 = arith.constant 0 : i32
    return %c0_i32, %c0_i32_0 : i32, i32
  }
  func.func @transform_24(%arg0: i32) -> (i32, i32) {
    %c0_i32 = arith.constant 0 : i32
    %c0_i32_0 = arith.constant 0 : i32
    %c0_i32_1 = arith.constant 0 : i32
    return %c0_i32, %c0_i32_0 : i32, i32
  }
  func.func @transform_25(%arg0: i32) -> (i32, i32) {
    %c0_i32 = arith.constant 0 : i32
    %c0_i32_0 = arith.constant 0 : i32
    %c0_i32_1 = arith.constant 0 : i32
    return %c0_i32, %c0_i32_0 : i32, i32
  }
}

</mosaic_0001>

<llo_original>
// kernel: ladder_forward.1
$region0: #{ladder_forward.1}
  #allocation0 [shape = 'u32[]', space=smem, size = 0x4, offset = 0x4, fixed_abs, tag = 'smem constant byte address 0x4 - core index']
  #allocation1 [shape = 'u32[144,128]{1,0:T(1,128)}', space=vmem, size = 0x12000, scoped, tag = 'internal scratch']
  %s0 = inlined_call_operand.vmem [shape: f32[16,16], index: 0, kind: input, shape index: {}]
  %s1 = inlined_call_operand.vmem [shape: f32[16,32], index: 1, kind: input, shape index: {}]
  %s2 = inlined_call_operand.vmem [shape: f32[16,32], index: 2, kind: input, shape index: {}]
  %s3 = inlined_call_operand.vmem [shape: f32[16,8], index: 3, kind: input, shape index: {}]
  %s4 = inlined_call_operand.vmem [shape: f32[16,32], index: 4, kind: input, shape index: {}]
  %s5 = inlined_call_operand.vmem [shape: f32[32,32], index: 5, kind: input, shape index: {}]
  %s6 = inlined_call_operand.vmem [shape: f32[32,8], index: 6, kind: input, shape index: {}]
  %s7 = inlined_call_operand.vmem [shape: f32[1,32], index: 7, kind: input, shape index: {}]
  %s8 = inlined_call_operand.vmem [shape: f32[1,32], index: 8, kind: input, shape index: {}]
  %s9 = inlined_call_operand.vmem [shape: f32[1,8], index: 9, kind: input, shape index: {}]
  %s10 = inlined_call_operand.vmem [shape: f32[5,8], index: 10, kind: input, shape index: {}]
  %s11 = inlined_call_operand.vmem [shape: f32[5,32], index: 11, kind: input, shape index: {}]
  %s12 = inlined_call_operand.vmem [shape: f32[5,32], index: 12, kind: input, shape index: {}]
  %s13 = inlined_call_operand.vmem [shape: f32[5,16], index: 13, kind: input, shape index: {}]
  %s14 = inlined_call_operand.vmem [shape: f32[5,8], index: 14, kind: input, shape index: {}]
  %s15 = inlined_call_operand.vmem [shape: f32[5,32], index: 15, kind: input, shape index: {}]
  %s16 = inlined_call_operand.vmem [shape: f32[5,32], index: 16, kind: input, shape index: {}]
  %s17 = inlined_call_operand.vmem [shape: f32[5,16], index: 17, kind: input, shape index: {}]
  %s18 = inlined_call_operand.vmem [shape: f32[8,32], index: 18, kind: input, shape index: {}]
  %s19 = inlined_call_operand.vmem [shape: f32[32,32], index: 19, kind: input, shape index: {}]
  %s20 = inlined_call_operand.vmem [shape: f32[32,16], index: 20, kind: input, shape index: {}]
  %s21 = inlined_call_operand.vmem [shape: f32[1,32], index: 21, kind: input, shape index: {}]
  %s22 = inlined_call_operand.vmem [shape: f32[1,32], index: 22, kind: input, shape index: {}]
  %s23 = inlined_call_operand.vmem [shape: f32[1,16], index: 23, kind: input, shape index: {}]
  %s24 = inlined_call_operand.hbm [shape: f32[8,8], index: 24, kind: output, shape index: {0}]
  %s25 = inlined_call_operand.hbm [shape: f32[1,1], index: 25, kind: output, shape index: {1}]
  %26 = xla_tuple %s24, %s25
  %s27 = sld [smem:[#allocation0]]
  $region114: #{ladder_forward.1} parent=0
    _
  %s29 = ssub.s32 1, %s27
  %s30 = scalar_select 0, %s29, %s27
  $region1: #{ladder_forward.1} parent=0
    #allocation2 [shape = 'u8[4096]{0}', space=vmem, size = 0x1000, scoped, tag = 'output window, operand 0, single buffered']
    #allocation3 [shape = 's32[1]{0}', space=sflag, size = 0x4, scoped, tag = 'scoped memory for ladder_forward.1']
    #allocation4 [shape = 'u8[512]{0}', space=vmem, size = 0x400, scoped, tag = 'output window, operand 1, single buffered']
    #allocation5 [shape = 's32[1]{0}', space=sflag, size = 0x4, scoped, tag = 'scoped memory for ladder_forward.1']
    %31 = vsyncpa [#allocation3], 0
    %32 = vsyncpa [#allocation5], 0
    // Predicated region
    $region2: #{ladder_forward.1} parent=1 // pred_check
      _
    $region3: #{ladder_forward.1} parent=1 // pred_check_branch
      %34 = sbr.rel (0) target = $region5
    $region4: #{ladder_forward.1} parent=1 // pred_region
      _
    $region5: #{ladder_forward.1} parent=1 // pred_fallthru
      _
    // Predicated region
    $region6: #{ladder_forward.1} parent=1 // pred_check
      _
    $region7: #{ladder_forward.1} parent=1 // pred_check_branch
      %36 = sbr.rel (0) target = $region9
    $region8: #{ladder_forward.1} parent=1 // pred_region
      _
    $region9: #{ladder_forward.1} parent=1 // pred_fallthru
      _
    // Predicated region
    $region10: #{ladder_forward.1} parent=1 // pred_check
      _
    $region11: #{ladder_forward.1} parent=1 // pred_check_branch
      %38 = sbr.rel (0) target = $region13
    $region12: #{ladder_forward.1} parent=1 // pred_region
      _
    $region13: #{ladder_forward.1} parent=1 // pred_fallthru
      _
    // Predicated region
    $region14: #{ladder_forward.1} parent=1 // pred_check
      _
    $region15: #{ladder_forward.1} parent=1 // pred_check_branch
      %40 = sbr.rel (0) target = $region17
    $region16: #{ladder_forward.1} parent=1 // pred_region
      _
    $region17: #{ladder_forward.1} parent=1 // pred_fallthru
      _
    // Predicated region
    $region18: #{ladder_forward.1} parent=1 // pred_check
      _
    $region19: #{ladder_forward.1} parent=1 // pred_check_branch
      %42 = sbr.rel (0) target = $region21
    $region20: #{ladder_forward.1} parent=1 // pred_region
      _
    $region21: #{ladder_forward.1} parent=1 // pred_fallthru
      _
    // Predicated region
    $region22: #{ladder_forward.1} parent=1 // pred_check
      _
    $region23: #{ladder_forward.1} parent=1 // pred_check_branch
      %44 = sbr.rel (0) target = $region25
    $region24: #{ladder_forward.1} parent=1 // pred_region
      _
    $region25: #{ladder_forward.1} parent=1 // pred_fallthru
      _
    // Predicated region
    $region26: #{ladder_forward.1} parent=1 // pred_check
      _
    $region27: #{ladder_forward.1} parent=1 // pred_check_branch
      %46 = sbr.rel (0) target = $region29
    $region28: #{ladder_forward.1} parent=1 // pred_region
      _
    $region29: #{ladder_forward.1} parent=1 // pred_fallthru
      _
    // Predicated region
    $region30: #{ladder_forward.1} parent=1 // pred_check
      _
    $region31: #{ladder_forward.1} parent=1 // pred_check_branch
      %48 = sbr.rel (0) target = $region33
    $region32: #{ladder_forward.1} parent=1 // pred_region
      _
    $region33: #{ladder_forward.1} parent=1 // pred_fallthru
      _
    // Predicated region
    $region34: #{ladder_forward.1} parent=1 // pred_check
      _
    $region35: #{ladder_forward.1} parent=1 // pred_check_branch
      %50 = sbr.rel (0) target = $region37
    $region36: #{ladder_forward.1} parent=1 // pred_region
      _
    $region37: #{ladder_forward.1} parent=1 // pred_fallthru
      _
    // Predicated region
    $region38: #{ladder_forward.1} parent=1 // pred_check
      _
    $region39: #{ladder_forward.1} parent=1 // pred_check_branch
      %52 = sbr.rel (0) target = $region41
    $region40: #{ladder_forward.1} parent=1 // pred_region
      _
    $region41: #{ladder_forward.1} parent=1 // pred_fallthru
      _
    // Predicated region
    $region42: #{ladder_forward.1} parent=1 // pred_check
      _
    $region43: #{ladder_forward.1} parent=1 // pred_check_branch
      %54 = sbr.rel (0) target = $region45
    $region44: #{ladder_forward.1} parent=1 // pred_region
      _
    $region45: #{ladder_forward.1} parent=1 // pred_fallthru
      _
    // Predicated region
    $region46: #{ladder_forward.1} parent=1 // pred_check
      _
    $region47: #{ladder_forward.1} parent=1 // pred_check_branch
      %56 = sbr.rel (0) target = $region49
    $region48: #{ladder_forward.1} parent=1 // pred_region
      _
    $region49: #{ladder_forward.1} parent=1 // pred_fallthru
      _
    // Predicated region
    $region50: #{ladder_forward.1} parent=1 // pred_check
      _
    $region51: #{ladder_forward.1} parent=1 // pred_check_branch
      %58 = sbr.rel (0) target = $region53
    $region52: #{ladder_forward.1} parent=1 // pred_region
      _
    $region53: #{ladder_forward.1} parent=1 // pred_fallthru
      _
    // Predicated region
    $region54: #{ladder_forward.1} parent=1 // pred_check
      _
    $region55: #{ladder_forward.1} parent=1 // pred_check_branch
      %60 = sbr.rel (0) target = $region57
    $region56: #{ladder_forward.1} parent=1 // pred_region
      _
    $region57: #{ladder_forward.1} parent=1 // pred_fallthru
      _
    // Predicated region
    $region58: #{ladder_forward.1} parent=1 // pred_check
      _
    $region59: #{ladder_forward.1} parent=1 // pred_check_branch
      %62 = sbr.rel (0) target = $region61
    $region60: #{ladder_forward.1} parent=1 // pred_region
      _
    $region61: #{ladder_forward.1} parent=1 // pred_fallthru
      _
    // Predicated region
    $region62: #{ladder_forward.1} parent=1 // pred_check
      _
    $region63: #{ladder_forward.1} parent=1 // pred_check_branch
      %64 = sbr.rel (0) target = $region65
    $region64: #{ladder_forward.1} parent=1 // pred_region
      _
    $region65: #{ladder_forward.1} parent=1 // pred_fallthru
      _
    // Predicated region
    $region66: #{ladder_forward.1} parent=1 // pred_check
      _
    $region67: #{ladder_forward.1} parent=1 // pred_check_branch
      %66 = sbr.rel (0) target = $region69
    $region68: #{ladder_forward.1} parent=1 // pred_region
      _
    $region69: #{ladder_forward.1} parent=1 // pred_fallthru
      _
    // Predicated region
    $region70: #{ladder_forward.1} parent=1 // pred_check
      _
    $region71: #{ladder_forward.1} parent=1 // pred_check_branch
      %68 = sbr.rel (0) target = $region73
    $region72: #{ladder_forward.1} parent=1 // pred_region
      _
    $region73: #{ladder_forward.1} parent=1 // pred_fallthru
      _
    // Predicated region
    $region74: #{ladder_forward.1} parent=1 // pred_check
      _
    $region75: #{ladder_forward.1} parent=1 // pred_check_branch
      %70 = sbr.rel (0) target = $region77
    $region76: #{ladder_forward.1} parent=1 // pred_region
      _
    $region77: #{ladder_forward.1} parent=1 // pred_fallthru
      _
    // Predicated region
    $region78: #{ladder_forward.1} parent=1 // pred_check
      _
    $region79: #{ladder_forward.1} parent=1 // pred_check_branch
      %72 = sbr.rel (0) target = $region81
    $region80: #{ladder_forward.1} parent=1 // pred_region
      _
    $region81: #{ladder_forward.1} parent=1 // pred_fallthru
      _
    // Predicated region
    $region82: #{ladder_forward.1} parent=1 // pred_check
      _
    $region83: #{ladder_forward.1} parent=1 // pred_check_branch
      %74 = sbr.rel (0) target = $region85
    $region84: #{ladder_forward.1} parent=1 // pred_region
      _
    $region85: #{ladder_forward.1} parent=1 // pred_fallthru
      _
    // Predicated region
    $region86: #{ladder_forward.1} parent=1 // pred_check
      _
    $region87: #{ladder_forward.1} parent=1 // pred_check_branch
      %76 = sbr.rel (0) target = $region89
    $region88: #{ladder_forward.1} parent=1 // pred_region
      _
    $region89: #{ladder_forward.1} parent=1 // pred_fallthru
      _
    // Predicated region
    $region90: #{ladder_forward.1} parent=1 // pred_check
      _
    $region91: #{ladder_forward.1} parent=1 // pred_check_branch
      %78 = sbr.rel (0) target = $region93
    $region92: #{ladder_forward.1} parent=1 // pred_region
      _
    $region93: #{ladder_forward.1} parent=1 // pred_fallthru
      _
    // Predicated region
    $region94: #{ladder_forward.1} parent=1 // pred_check
      _
    $region95: #{ladder_forward.1} parent=1 // pred_check_branch
      %80 = sbr.rel (0) target = $region97
    $region96: #{ladder_forward.1} parent=1 // pred_region
      _
    $region97: #{ladder_forward.1} parent=1 // pred_fallthru
      _
    %v81 = vld [vmem:[%s0] sm:$0xff]
    %v82 = vld [vmem:[%s0 + $0x8] sm:$0xff]
    %v83 = vld [vmem:[%s4] sm:$0xff]
    %v84 = vld [vmem:[%s4 + $0x8] sm:$0xff]
    %v85 = vld [vmem:[%s7] sm:$0x1]
    %v87 = vlaneseq
    %v88 = vshrl.u32 %v87, 7
    %v89 = vsub.s32 0, %v88
    %v90 = vrot.slane %v85, %v89
    %vm92 = vcmask 130048
    %v94 = vsel %vm92, %v81, 0
    %v97 = vsel %vm92, %v82, 0
    %99 = vmatprep.subr.mxu0 0.0
    %100 = vmatpush1.msra.mxu0 %v83
    %101 = vmatprep.subr.mxu0 0.0
    %102 = vmatpush1.msra.mxu0 %v84
    %103 = vmatprep.subr.mxu0 0.0
    %104 = vmatpush1.msra.mxu0 0.0
    %105 = vmatprep.subr.mxu0 0.0
    %106 = vmatpush1.msra.mxu0 0.0
    %107 = vmatprep.subr.mxu0 0.0
    %108 = vmatpush1.msra.mxu0 0.0
    %109 = vmatprep.subr.mxu0 0.0
    %110 = vmatpush1.msra.mxu0 0.0
    %111 = vmatprep.subr.mxu0 0.0
    %112 = vmatpush1.msra.mxu0 0.0
    %113 = vmatprep.subr.mxu0 0.0
    %114 = vmatpush1.msra.mxu0 0.0
    %115 = vmatprep.subr.mxu0 0.0
    %116 = vmatpush1.msra.mxu0 0.0
    %117 = vmatprep.subr.mxu0 0.0
    %118 = vmatpush1.msra.mxu0 0.0
    %119 = vmatprep.subr.mxu0 0.0
    %120 = vmatpush1.msra.mxu0 0.0
    %121 = vmatprep.subr.mxu0 0.0
    %122 = vmatpush1.msra.mxu0 0.0
    %123 = vmatprep.subr.mxu0 0.0
    %124 = vmatpush1.msra.mxu0 0.0
    %125 = vmatprep.subr.mxu0 0.0
    %126 = vmatpush1.msra.mxu0 0.0
    %127 = vmatprep.subr.mxu0 0.0
    %128 = vmatpush1.msra.mxu0 0.0
    %129 = vmatprep.subr.mxu0 0.0
    %130 = vmatpush1.msra.mxu0 0.0
    %131 = vmatprep.subr.mxu0 0.0
    %132 = vmatpush1.msra.mxu0 0.0
    %133 = vmatprep.subr.mxu0 0.0
    %134 = vmatpush1.msra.mxu0 0.0
    %135 = vmatprep.subr.mxu0 0.0
    %136 = vmatpush1.msra.mxu0 0.0
    %137 = vmatprep.subr.mxu0 0.0
    %138 = vmatpush1.msra.mxu0 0.0
    %139 = vmatprep.subr.mxu0 0.0
    %140 = vmatpush1.msra.mxu0 0.0
    %141 = vmatprep.subr.mxu0 0.0
    %142 = vmatpush1.msra.mxu0 0.0
    %143 = vmatprep.subr.mxu0 0.0
    %144 = vmatpush1.msra.mxu0 0.0
    %145 = vmatprep.subr.mxu0 0.0
    %146 = vmatpush1.msra.mxu0 0.0
    %147 = vmatprep.subr.mxu0 0.0
    %148 = vmatpush1.msra.mxu0 0.0
    %149 = vmatprep.subr.mxu0 0.0
    %150 = vmatpush1.msra.mxu0 0.0
    %151 = vmatprep.subr.mxu0 0.0
    %152 = vmatpush1.msra.mxu0 0.0
    %153 = vmatprep.subr.mxu0 0.0
    %154 = vmatpush1.msra.mxu0 0.0
    %155 = vmatprep.subr.mxu0 0.0
    %156 = vmatpush1.msra.mxu0 0.0
    %157 = vmatprep.subr.mxu0 0.0
    %158 = vmatpush1.msra.mxu0 0.0
    %159 = vmatprep.subr.mxu0 0.0
    %160 = vmatpush1.msra.mxu0 0.0
    %161 = vmatprep.subr.mxu0 0.0
    %162 = vmatpush1.msra.mxu0 0.0
    %163 = vmatprep.mubr.f32.mxu0 0.0
    %164 = vmatmul.mubr.f32.gmra.mrb[0].mxu0 %v94
    %v165 = vpop.f32.mrb[0].mxu0
    %v166 = vadd.f32 %v90, %v165
    %v167 = vpop.f32.mrb[0].mxu0
    %168 = vmatprep.mubr.f32.mxu0 0.0
    %169 = vmatmul.mubr.f32.gmra.mrb[0].mxu0 %v97
    %v170 = vpop.f32.mrb[0].mxu0
    %v171 = vadd.f32 %v90, %v170
    %v172 = vpop.f32.mrb[0].mxu0
    %173 = vdwg.mxu0
    %v174 = vld [vmem:[%s1] sm:$0xff]
    %v175 = vld [vmem:[%s1 + $0x8] sm:$0xff]
    %v176 = vadd.f32 %v166, %v174
    %v177 = vadd.f32 %v171, %v175
    %v178 = vmax.f32 %v176, 0.0
    %v179 = vmax.f32 %v177, 0.0
    %v180 = vld [vmem:[%s5] sm:$0xff]
    %v181 = vld [vmem:[%s5 + $0x8] sm:$0xff]
    %v182 = vld [vmem:[%s5 + $0x10] sm:$0xff]
    %v183 = vld [vmem:[%s5 + $0x18] sm:$0xff]
    %v184 = vld [vmem:[%s8] sm:$0x1]
    %v186 = vlaneseq
    %v187 = vshrl.u32 %v186, 7
    %v188 = vsub.s32 0, %v187
    %v189 = vrot.slane %v184, %v188
    %vm191 = vcmask 261120
    %v193 = vsel %vm191, %v178, 0
    %v196 = vsel %vm191, %v179, 0
    %198 = vmatprep.subr.mxu0 0.0
    %199 = vmatpush1.msra.mxu0 %v180
    %200 = vmatprep.subr.mxu0 0.0
    %201 = vmatpush1.msra.mxu0 %v181
    %202 = vmatprep.subr.mxu0 0.0
    %203 = vmatpush1.msra.mxu0 %v182
    %204 = vmatprep.subr.mxu0 0.0
    %205 = vmatpush1.msra.mxu0 %v183
    %206 = vmatprep.subr.mxu0 0.0
    %207 = vmatpush1.msra.mxu0 0.0
    %208 = vmatprep.subr.mxu0 0.0
    %209 = vmatpush1.msra.mxu0 0.0
    %210 = vmatprep.subr.mxu0 0.0
    %211 = vmatpush1.msra.mxu0 0.0
    %212 = vmatprep.subr.mxu0 0.0
    %213 = vmatpush1.msra.mxu0 0.0
    %214 = vmatprep.subr.mxu0 0.0
    %215 = vmatpush1.msra.mxu0 0.0
    %216 = vmatprep.subr.mxu0 0.0
    %217 = vmatpush1.msra.mxu0 0.0
    %218 = vmatprep.subr.mxu0 0.0
    %219 = vmatpush1.msra.mxu0 0.0
    %220 = vmatprep.subr.mxu0 0.0
    %221 = vmatpush1.msra.mxu0 0.0
    %222 = vmatprep.subr.mxu0 0.0
    %223 = vmatpush1.msra.mxu0 0.0
    %224 = vmatprep.subr.mxu0 0.0
    %225 = vmatpush1.msra.mxu0 0.0
    %226 = vmatprep.subr.mxu0 0.0
    %227 = vmatpush1.msra.mxu0 0.0
    %228 = vmatprep.subr.mxu0 0.0
    %229 = vmatpush1.msra.mxu0 0.0
    %230 = vmatprep.subr.mxu0 0.0
    %231 = vmatpush1.msra.mxu0 0.0
    %232 = vmatprep.subr.mxu0 0.0
    %233 = vmatpush1.msra.mxu0 0.0
    %234 = vmatprep.subr.mxu0 0.0
    %235 = vmatpush1.msra.mxu0 0.0
    %236 = vmatprep.subr.mxu0 0.0
    %237 = vmatpush1.msra.mxu0 0.0
    %238 = vmatprep.subr.mxu0 0.0
    %239 = vmatpush1.msra.mxu0 0.0
    %240 = vmatprep.subr.mxu0 0.0
    %241 = vmatpush1.msra.mxu0 0.0
    %242 = vmatprep.subr.mxu0 0.0
    %243 = vmatpush1.msra.mxu0 0.0
    %244 = vmatprep.subr.mxu0 0.0
    %245 = vmatpush1.msra.mxu0 0.0
    %246 = vmatprep.subr.mxu0 0.0
    %247 = vmatpush1.msra.mxu0 0.0
    %248 = vmatprep.subr.mxu0 0.0
    %249 = vmatpush1.msra.mxu0 0.0
    %250 = vmatprep.subr.mxu0 0.0
    %251 = vmatpush1.msra.mxu0 0.0
    %252 = vmatprep.subr.mxu0 0.0
    %253 = vmatpush1.msra.mxu0 0.0
    %254 = vmatprep.subr.mxu0 0.0
    %255 = vmatpush1.msra.mxu0 0.0
    %256 = vmatprep.subr.mxu0 0.0
    %257 = vmatpush1.msra.mxu0 0.0
    %258 = vmatprep.subr.mxu0 0.0
    %259 = vmatpush1.msra.mxu0 0.0
    %260 = vmatprep.subr.mxu0 0.0
    %261 = vmatpush1.msra.mxu0 0.0
    %262 = vmatprep.mubr.f32.mxu0 0.0
    %263 = vmatmul.mubr.f32.gmra.mrb[0].mxu0 %v193
    %v264 = vpop.f32.mrb[0].mxu0
    %v265 = vadd.f32 %v189, %v264
    %v266 = vpop.f32.mrb[0].mxu0
    %267 = vmatprep.mubr.f32.mxu0 0.0
    %268 = vmatmul.mubr.f32.gmra.mrb[0].mxu0 %v196
    %v269 = vpop.f32.mrb[0].mxu0
    %v270 = vadd.f32 %v189, %v269
    %v271 = vpop.f32.mrb[0].mxu0
    %272 = vdwg.mxu0
    %v273 = vld [vmem:[%s2] sm:$0xff]
    %v274 = vld [vmem:[%s2 + $0x8] sm:$0xff]
    %v275 = vadd.f32 %v265, %v273
    %v276 = vadd.f32 %v270, %v274
    %v277 = vmax.f32 %v275, 0.0
    %v278 = vmax.f32 %v276, 0.0
    %v279 = vld [vmem:[%s6] sm:$0xff]
    %v280 = vld [vmem:[%s6 + $0x8] sm:$0xff]
    %v281 = vld [vmem:[%s6 + $0x10] sm:$0xff]
    %v282 = vld [vmem:[%s6 + $0x18] sm:$0xff]
    %v283 = vld [vmem:[%s9] sm:$0x1]
    %v285 = vlaneseq
    %v286 = vshrl.u32 %v285, 7
    %v287 = vsub.s32 0, %v286
    %v288 = vrot.slane %v283, %v287
    %v291 = vsel %vm191, %v277, 0
    %v294 = vsel %vm191, %v278, 0
    %296 = vmatprep.subr.mxu0 0.0
    %297 = vmatpush1.msra.mxu0 %v279
    %298 = vmatprep.subr.mxu0 0.0
    %299 = vmatpush1.msra.mxu0 %v280
    %300 = vmatprep.subr.mxu0 0.0
    %301 = vmatpush1.msra.mxu0 %v281
    %302 = vmatprep.subr.mxu0 0.0
    %303 = vmatpush1.msra.mxu0 %v282
    %304 = vmatprep.subr.mxu0 0.0
    %305 = vmatpush1.msra.mxu0 0.0
    %306 = vmatprep.subr.mxu0 0.0
    %307 = vmatpush1.msra.mxu0 0.0
    %308 = vmatprep.subr.mxu0 0.0
    %309 = vmatpush1.msra.mxu0 0.0
    %310 = vmatprep.subr.mxu0 0.0
    %311 = vmatpush1.msra.mxu0 0.0
    %312 = vmatprep.subr.mxu0 0.0
    %313 = vmatpush1.msra.mxu0 0.0
    %314 = vmatprep.subr.mxu0 0.0
    %315 = vmatpush1.msra.mxu0 0.0
    %316 = vmatprep.subr.mxu0 0.0
    %317 = vmatpush1.msra.mxu0 0.0
    %318 = vmatprep.subr.mxu0 0.0
    %319 = vmatpush1.msra.mxu0 0.0
    %320 = vmatprep.subr.mxu0 0.0
    %321 = vmatpush1.msra.mxu0 0.0
    %322 = vmatprep.subr.mxu0 0.0
    %323 = vmatpush1.msra.mxu0 0.0
    %324 = vmatprep.subr.mxu0 0.0
    %325 = vmatpush1.msra.mxu0 0.0
    %326 = vmatprep.subr.mxu0 0.0
    %327 = vmatpush1.msra.mxu0 0.0
    %328 = vmatprep.subr.mxu0 0.0
    %329 = vmatpush1.msra.mxu0 0.0
    %330 = vmatprep.subr.mxu0 0.0
    %331 = vmatpush1.msra.mxu0 0.0
    %332 = vmatprep.subr.mxu0 0.0
    %333 = vmatpush1.msra.mxu0 0.0
    %334 = vmatprep.subr.mxu0 0.0
    %335 = vmatpush1.msra.mxu0 0.0
    %336 = vmatprep.subr.mxu0 0.0
    %337 = vmatpush1.msra.mxu0 0.0
    %338 = vmatprep.subr.mxu0 0.0
    %339 = vmatpush1.msra.mxu0 0.0
    %340 = vmatprep.subr.mxu0 0.0
    %341 = vmatpush1.msra.mxu0 0.0
    %342 = vmatprep.subr.mxu0 0.0
    %343 = vmatpush1.msra.mxu0 0.0
    %344 = vmatprep.subr.mxu0 0.0
    %345 = vmatpush1.msra.mxu0 0.0
    %346 = vmatprep.subr.mxu0 0.0
    %347 = vmatpush1.msra.mxu0 0.0
    %348 = vmatprep.subr.mxu0 0.0
    %349 = vmatpush1.msra.mxu0 0.0
    %350 = vmatprep.subr.mxu0 0.0
    %351 = vmatpush1.msra.mxu0 0.0
    %352 = vmatprep.subr.mxu0 0.0
    %353 = vmatpush1.msra.mxu0 0.0
    %354 = vmatprep.subr.mxu0 0.0
    %355 = vmatpush1.msra.mxu0 0.0
    %356 = vmatprep.subr.mxu0 0.0
    %357 = vmatpush1.msra.mxu0 0.0
    %358 = vmatprep.subr.mxu0 0.0
    %359 = vmatpush1.msra.mxu0 0.0
    %360 = vmatprep.mubr.f32.mxu0 0.0
    %361 = vmatmul.mubr.f32.gmra.mrb[0].mxu0 %v291
    %v362 = vpop.f32.mrb[0].mxu0
    %v363 = vadd.f32 %v288, %v362
    %v364 = vpop.f32.mrb[0].mxu0
    %365 = vmatprep.mubr.f32.mxu0 0.0
    %366 = vmatmul.mubr.f32.gmra.mrb[0].mxu0 %v294
    %v367 = vpop.f32.mrb[0].mxu0
    %v368 = vadd.f32 %v288, %v367
    %v369 = vpop.f32.mrb[0].mxu0
    %370 = vdwg.mxu0
    %v371 = vld [vmem:[%s3] sm:$0xff]
    %v372 = vld [vmem:[%s3 + $0x8] sm:$0xff]
    %v373 = vadd.f32 %v363, %v371
    %v374 = vadd.f32 %v368, %v372
    %v375 = vld [vmem:[%s10] sm:$0x1f]
    %v376 = vld [vmem:[%s14] sm:$0x1f]
    %v377 = vlaneseq
    %v378 = vshrl.u32 %v377, 7
    %v379 = vsub.s32 1, %v378
    %v380 = vrot.slane %v375, %v379
    %v381 = vmul.f32 %v380, %v374
    %v382 = vlaneseq
    %v383 = vshrl.u32 %v382, 7
    %v384 = vsub.s32 2, %v383
    %v385 = vrot.slane %v375, %v384
    %v386 = vadd.f32 %v381, %v385
    %v387 = vxor.u32 %v386, 2147483648
    %v388 = vmul.f32 %v387, 1.442695
    %v389 = vpow.pop %v388
    %v390 = vadd.f32 %v389, 1.0
    %v391 = vrcp.pop %v390
    %v392 = vmul.f32 1.0, %v391
    %v393 = vlaneseq
    %v394 = vshrl.u32 %v393, 7
    %v395 = vsub.s32 0, %v394
    %v396 = vrot.slane %v375, %v395
    %v397 = vmul.f32 %v396, %v392
    %v398 = vlaneseq
    %v399 = vshrl.u32 %v398, 7
    %v400 = vsub.s32 3, %v399
    %v401 = vrot.slane %v375, %v400
    %v402 = vmul.f32 %v401, %v374
    %v403 = vadd.f32 %v397, %v402
    %v404 = vlaneseq
    %v405 = vshrl.u32 %v404, 7
    %v406 = vsub.s32 4, %v405
    %v407 = vrot.slane %v375, %v406
    %v408 = vadd.f32 %v403, %v407
    %v409 = vlaneseq
    %v410 = vshrl.u32 %v409, 7
    %v411 = vsub.s32 1, %v410
    %v412 = vrot.slane %v376, %v411
    %v413 = vmul.f32 %v412, %v374
    %v414 = vlaneseq
    %v415 = vshrl.u32 %v414, 7
    %v416 = vsub.s32 2, %v415
    %v417 = vrot.slane %v376, %v416
    %v418 = vadd.f32 %v413, %v417
    %v419 = vxor.u32 %v418, 2147483648
    %v420 = vmul.f32 %v419, 1.442695
    %v421 = vpow.pop %v420
    %v422 = vadd.f32 %v421, 1.0
    %v423 = vrcp.pop %v422
    %v424 = vmul.f32 1.0, %v423
    %v425 = vlaneseq
    %v426 = vshrl.u32 %v425, 7
    %v427 = vsub.s32 0, %v426
    %v428 = vrot.slane %v376, %v427
    %v429 = vmul.f32 %v428, %v424
    %v430 = vlaneseq
    %v431 = vshrl.u32 %v430, 7
    %v432 = vsub.s32 3, %v431
    %v433 = vrot.slane %v376, %v432
    %v434 = vmul.f32 %v433, %v374
    %v435 = vadd.f32 %v429, %v434
    %v436 = vlaneseq
    %v437 = vshrl.u32 %v436, 7
    %v438 = vsub.s32 4, %v437
    %v439 = vrot.slane %v376, %v438
    %v440 = vadd.f32 %v435, %v439
    %v441 = vsub.f32 %v374, %v408
    %v442 = vmul.f32 %v441, %v440
    %v443 = vadd.f32 %v442, %v408
    %v444 = vld [vmem:[%s18] sm:$0xff]
    %v445 = vld [vmem:[%s21] sm:$0x1]
    %v447 = vlaneseq
    %v448 = vshrl.u32 %v447, 7
    %v449 = vsub.s32 0, %v448
    %v450 = vrot.slane %v445, %v449
    %vm452 = vcmask 64512
    %v454 = vsel %vm452, %v443, 0
    %456 = vmatprep.subr.mxu0 0.0
    %457 = vmatpush1.msra.mxu0 %v444
    %458 = vmatprep.subr.mxu0 0.0
    %459 = vmatpush1.msra.mxu0 0.0
    %460 = vmatprep.subr.mxu0 0.0
    %461 = vmatpush1.msra.mxu0 0.0
    %462 = vmatprep.subr.mxu0 0.0
    %463 = vmatpush1.msra.mxu0 0.0
    %464 = vmatprep.subr.mxu0 0.0
    %465 = vmatpush1.msra.mxu0 0.0
    %466 = vmatprep.subr.mxu0 0.0
    %467 = vmatpush1.msra.mxu0 0.0
    %468 = vmatprep.subr.mxu0 0.0
    %469 = vmatpush1.msra.mxu0 0.0
    %470 = vmatprep.subr.mxu0 0.0
    %471 = vmatpush1.msra.mxu0 0.0
    %472 = vmatprep.subr.mxu0 0.0
    %473 = vmatpush1.msra.mxu0 0.0
    %474 = vmatprep.subr.mxu0 0.0
    %475 = vmatpush1.msra.mxu0 0.0
    %476 = vmatprep.subr.mxu0 0.0
    %477 = vmatpush1.msra.mxu0 0.0
    %478 = vmatprep.subr.mxu0 0.0
    %479 = vmatpush1.msra.mxu0 0.0
    %480 = vmatprep.subr.mxu0 0.0
    %481 = vmatpush1.msra.mxu0 0.0
    %482 = vmatprep.subr.mxu0 0.0
    %483 = vmatpush1.msra.mxu0 0.0
    %484 = vmatprep.subr.mxu0 0.0
    %485 = vmatpush1.msra.mxu0 0.0
    %486 = vmatprep.subr.mxu0 0.0
    %487 = vmatpush1.msra.mxu0 0.0
    %488 = vmatprep.subr.mxu0 0.0
    %489 = vmatpush1.msra.mxu0 0.0
    %490 = vmatprep.subr.mxu0 0.0
    %491 = vmatpush1.msra.mxu0 0.0
    %492 = vmatprep.subr.mxu0 0.0
    %493 = vmatpush1.msra.mxu0 0.0
    %494 = vmatprep.subr.mxu0 0.0
    %495 = vmatpush1.msra.mxu0 0.0
    %496 = vmatprep.subr.mxu0 0.0
    %497 = vmatpush1.msra.mxu0 0.0
    %498 = vmatprep.subr.mxu0 0.0
    %499 = vmatpush1.msra.mxu0 0.0
    %500 = vmatprep.subr.mxu0 0.0
    %501 = vmatpush1.msra.mxu0 0.0
    %502 = vmatprep.subr.mxu0 0.0
    %503 = vmatpush1.msra.mxu0 0.0
    %504 = vmatprep.subr.mxu0 0.0
    %505 = vmatpush1.msra.mxu0 0.0
    %506 = vmatprep.subr.mxu0 0.0
    %507 = vmatpush1.msra.mxu0 0.0
    %508 = vmatprep.subr.mxu0 0.0
    %509 = vmatpush1.msra.mxu0 0.0
    %510 = vmatprep.subr.mxu0 0.0
    %511 = vmatpush1.msra.mxu0 0.0
    %512 = vmatprep.subr.mxu0 0.0
    %513 = vmatpush1.msra.mxu0 0.0
    %514 = vmatprep.subr.mxu0 0.0
    %515 = vmatpush1.msra.mxu0 0.0
    %516 = vmatprep.subr.mxu0 0.0
    %517 = vmatpush1.msra.mxu0 0.0
    %518 = vmatprep.subr.mxu0 0.0
    %519 = vmatpush1.msra.mxu0 0.0
    %520 = vmatprep.mubr.f32.mxu0 0.0
    %521 = vmatmul.mubr.f32.gmra.mrb[0].mxu0 %v454
    %v522 = vpop.f32.mrb[0].mxu0
    %v523 = vadd.f32 %v450, %v522
    %v524 = vpop.f32.mrb[0].mxu0
    %525 = vdwg.mxu0
    %v526 = vld [vmem:[%s11] sm:$0x1f]
    %v527 = vld [vmem:[%s15] sm:$0x1f]
    %v528 = vlaneseq
    %v529 = vshrl.u32 %v528, 7
    %v530 = vsub.s32 1, %v529
    %v531 = vrot.slane %v526, %v530
    %v532 = vmul.f32 %v531, %v523
    %v533 = vlaneseq
    %v534 = vshrl.u32 %v533, 7
    %v535 = vsub.s32 2, %v534
    %v536 = vrot.slane %v526, %v535
    %v537 = vadd.f32 %v532, %v536
    %v538 = vxor.u32 %v537, 2147483648
    %v539 = vmul.f32 %v538, 1.442695
    %v540 = vpow.pop %v539
    %v541 = vadd.f32 %v540, 1.0
    %v542 = vrcp.pop %v541
    %v543 = vmul.f32 1.0, %v542
    %v544 = vlaneseq
    %v545 = vshrl.u32 %v544, 7
    %v546 = vsub.s32 0, %v545
    %v547 = vrot.slane %v526, %v546
    %v548 = vmul.f32 %v547, %v543
    %v549 = vlaneseq
    %v550 = vshrl.u32 %v549, 7
    %v551 = vsub.s32 3, %v550
    %v552 = vrot.slane %v526, %v551
    %v553 = vmul.f32 %v552, %v523
    %v554 = vadd.f32 %v548, %v553
    %v555 = vlaneseq
    %v556 = vshrl.u32 %v555, 7
    %v557 = vsub.s32 4, %v556
    %v558 = vrot.slane %v526, %v557
    %v559 = vadd.f32 %v554, %v558
    %v560 = vlaneseq
    %v561 = vshrl.u32 %v560, 7
    %v562 = vsub.s32 1, %v561
    %v563 = vrot.slane %v527, %v562
    %v564 = vmul.f32 %v563, %v523
    %v565 = vlaneseq
    %v566 = vshrl.u32 %v565, 7
    %v567 = vsub.s32 2, %v566
    %v568 = vrot.slane %v527, %v567
    %v569 = vadd.f32 %v564, %v568
    %v570 = vxor.u32 %v569, 2147483648
    %v571 = vmul.f32 %v570, 1.442695
    %v572 = vpow.pop %v571
    %v573 = vadd.f32 %v572, 1.0
    %v574 = vrcp.pop %v573
    %v575 = vmul.f32 1.0, %v574
    %v576 = vlaneseq
    %v577 = vshrl.u32 %v576, 7
    %v578 = vsub.s32 0, %v577
    %v579 = vrot.slane %v527, %v578
    %v580 = vmul.f32 %v579, %v575
    %v581 = vlaneseq
    %v582 = vshrl.u32 %v581, 7
    %v583 = vsub.s32 3, %v582
    %v584 = vrot.slane %v527, %v583
    %v585 = vmul.f32 %v584, %v523
    %v586 = vadd.f32 %v580, %v585
    %v587 = vlaneseq
    %v588 = vshrl.u32 %v587, 7
    %v589 = vsub.s32 4, %v588
    %v590 = vrot.slane %v527, %v589
    %v591 = vadd.f32 %v586, %v590
    %v592 = vsub.f32 %v276, %v559
    %v593 = vmul.f32 %v592, %v591
    %v594 = vadd.f32 %v593, %v559
    %v595 = vld [vmem:[%s19] sm:$0xff]
    %v596 = vld [vmem:[%s19 + $0x8] sm:$0xff]
    %v597 = vld [vmem:[%s19 + $0x10] sm:$0xff]
    %v598 = vld [vmem:[%s19 + $0x18] sm:$0xff]
    %v599 = vld [vmem:[%s22] sm:$0x1]
    %v601 = vlaneseq
    %v602 = vshrl.u32 %v601, 7
    %v603 = vsub.s32 0, %v602
    %v604 = vrot.slane %v599, %v603
    %v607 = vsel %vm191, %v594, 0
    %609 = vmatprep.subr.mxu0 0.0
    %610 = vmatpush1.msra.mxu0 %v595
    %611 = vmatprep.subr.mxu0 0.0
    %612 = vmatpush1.msra.mxu0 %v596
    %613 = vmatprep.subr.mxu0 0.0
    %614 = vmatpush1.msra.mxu0 %v597
    %615 = vmatprep.subr.mxu0 0.0
    %616 = vmatpush1.msra.mxu0 %v598
    %617 = vmatprep.subr.mxu0 0.0
    %618 = vmatpush1.msra.mxu0 0.0
    %619 = vmatprep.subr.mxu0 0.0
    %620 = vmatpush1.msra.mxu0 0.0
    %621 = vmatprep.subr.mxu0 0.0
    %622 = vmatpush1.msra.mxu0 0.0
    %623 = vmatprep.subr.mxu0 0.0
    %624 = vmatpush1.msra.mxu0 0.0
    %625 = vmatprep.subr.mxu0 0.0
    %626 = vmatpush1.msra.mxu0 0.0
    %627 = vmatprep.subr.mxu0 0.0
    %628 = vmatpush1.msra.mxu0 0.0
    %629 = vmatprep.subr.mxu0 0.0
    %630 = vmatpush1.msra.mxu0 0.0
    %631 = vmatprep.subr.mxu0 0.0
    %632 = vmatpush1.msra.mxu0 0.0
    %633 = vmatprep.subr.mxu0 0.0
    %634 = vmatpush1.msra.mxu0 0.0
    %635 = vmatprep.subr.mxu0 0.0
    %636 = vmatpush1.msra.mxu0 0.0
    %637 = vmatprep.subr.mxu0 0.0
    %638 = vmatpush1.msra.mxu0 0.0
    %639 = vmatprep.subr.mxu0 0.0
    %640 = vmatpush1.msra.mxu0 0.0
    %641 = vmatprep.subr.mxu0 0.0
    %642 = vmatpush1.msra.mxu0 0.0
    %643 = vmatprep.subr.mxu0 0.0
    %644 = vmatpush1.msra.mxu0 0.0
    %645 = vmatprep.subr.mxu0 0.0
    %646 = vmatpush1.msra.mxu0 0.0
    %647 = vmatprep.subr.mxu0 0.0
    %648 = vmatpush1.msra.mxu0 0.0
    %649 = vmatprep.subr.mxu0 0.0
    %650 = vmatpush1.msra.mxu0 0.0
    %651 = vmatprep.subr.mxu0 0.0
    %652 = vmatpush1.msra.mxu0 0.0
    %653 = vmatprep.subr.mxu0 0.0
    %654 = vmatpush1.msra.mxu0 0.0
    %655 = vmatprep.subr.mxu0 0.0
    %656 = vmatpush1.msra.mxu0 0.0
    %657 = vmatprep.subr.mxu0 0.0
    %658 = vmatpush1.msra.mxu0 0.0
    %659 = vmatprep.subr.mxu0 0.0
    %660 = vmatpush1.msra.mxu0 0.0
    %661 = vmatprep.subr.mxu0 0.0
    %662 = vmatpush1.msra.mxu0 0.0
    %663 = vmatprep.subr.mxu0 0.0
    %664 = vmatpush1.msra.mxu0 0.0
    %665 = vmatprep.subr.mxu0 0.0
    %666 = vmatpush1.msra.mxu0 0.0
    %667 = vmatprep.subr.mxu0 0.0
    %668 = vmatpush1.msra.mxu0 0.0
    %669 = vmatprep.subr.mxu0 0.0
    %670 = vmatpush1.msra.mxu0 0.0
    %671 = vmatprep.subr.mxu0 0.0
    %672 = vmatpush1.msra.mxu0 0.0
    %673 = vmatprep.mubr.f32.mxu0 0.0
    %674 = vmatmul.mubr.f32.gmra.mrb[0].mxu0 %v607
    %v675 = vpop.f32.mrb[0].mxu0
    %v676 = vadd.f32 %v604, %v675
    %v677 = vpop.f32.mrb[0].mxu0
    %678 = vdwg.mxu0
    %v679 = vld [vmem:[%s12] sm:$0x1f]
    %v680 = vld [vmem:[%s16] sm:$0x1f]
    %v681 = vlaneseq
    %v682 = vshrl.u32 %v681, 7
    %v683 = vsub.s32 1, %v682
    %v684 = vrot.slane %v679, %v683
    %v685 = vmul.f32 %v684, %v676
    %v686 = vlaneseq
    %v687 = vshrl.u32 %v686, 7
    %v688 = vsub.s32 2, %v687
    %v689 = vrot.slane %v679, %v688
    %v690 = vadd.f32 %v685, %v689
    %v691 = vxor.u32 %v690, 2147483648
    %v692 = vmul.f32 %v691, 1.442695
    %v693 = vpow.pop %v692
    %v694 = vadd.f32 %v693, 1.0
    %v695 = vrcp.pop %v694
    %v696 = vmul.f32 1.0, %v695
    %v697 = vlaneseq
    %v698 = vshrl.u32 %v697, 7
    %v699 = vsub.s32 0, %v698
    %v700 = vrot.slane %v679, %v699
    %v701 = vmul.f32 %v700, %v696
    %v702 = vlaneseq
    %v703 = vshrl.u32 %v702, 7
    %v704 = vsub.s32 3, %v703
    %v705 = vrot.slane %v679, %v704
    %v706 = vmul.f32 %v705, %v676
    %v707 = vadd.f32 %v701, %v706
    %v708 = vlaneseq
    %v709 = vshrl.u32 %v708, 7
    %v710 = vsub.s32 4, %v709
    %v711 = vrot.slane %v679, %v710
    %v712 = vadd.f32 %v707, %v711
    %v713 = vlaneseq
    %v714 = vshrl.u32 %v713, 7
    %v715 = vsub.s32 1, %v714
    %v716 = vrot.slane %v680, %v715
    %v717 = vmul.f32 %v716, %v676
    %v718 = vlaneseq
    %v719 = vshrl.u32 %v718, 7
    %v720 = vsub.s32 2, %v719
    %v721 = vrot.slane %v680, %v720
    %v722 = vadd.f32 %v717, %v721
    %v723 = vxor.u32 %v722, 2147483648
    %v724 = vmul.f32 %v723, 1.442695
    %v725 = vpow.pop %v724
    %v726 = vadd.f32 %v725, 1.0
    %v727 = vrcp.pop %v726
    %v728 = vmul.f32 1.0, %v727
    %v729 = vlaneseq
    %v730 = vshrl.u32 %v729, 7
    %v731 = vsub.s32 0, %v730
    %v732 = vrot.slane %v680, %v731
    %v733 = vmul.f32 %v732, %v728
    %v734 = vlaneseq
    %v735 = vshrl.u32 %v734, 7
    %v736 = vsub.s32 3, %v735
    %v737 = vrot.slane %v680, %v736
    %v738 = vmul.f32 %v737, %v676
    %v739 = vadd.f32 %v733, %v738
    %v740 = vlaneseq
    %v741 = vshrl.u32 %v740, 7
    %v742 = vsub.s32 4, %v741
    %v743 = vrot.slane %v680, %v742
    %v744 = vadd.f32 %v739, %v743
    %v745 = vsub.f32 %v177, %v712
    %v746 = vmul.f32 %v745, %v744
    %v747 = vadd.f32 %v746, %v712
    %v748 = vld [vmem:[%s20] sm:$0xff]
    %v749 = vld [vmem:[%s20 + $0x8] sm:$0xff]
    %v750 = vld [vmem:[%s20 + $0x10] sm:$0xff]
    %v751 = vld [vmem:[%s20 + $0x18] sm:$0xff]
    %v752 = vld [vmem:[%s23] sm:$0x1]
    %v754 = vlaneseq
    %v755 = vshrl.u32 %v754, 7
    %v756 = vsub.s32 0, %v755
    %v757 = vrot.slane %v752, %v756
    %v760 = vsel %vm191, %v747, 0
    %762 = vmatprep.subr.mxu0 0.0
    %763 = vmatpush1.msra.mxu0 %v748
    %764 = vmatprep.subr.mxu0 0.0
    %765 = vmatpush1.msra.mxu0 %v749
    %766 = vmatprep.subr.mxu0 0.0
    %767 = vmatpush1.msra.mxu0 %v750
    %768 = vmatprep.subr.mxu0 0.0
    %769 = vmatpush1.msra.mxu0 %v751
    %770 = vmatprep.subr.mxu0 0.0
    %771 = vmatpush1.msra.mxu0 0.0
    %772 = vmatprep.subr.mxu0 0.0
    %773 = vmatpush1.msra.mxu0 0.0
    %774 = vmatprep.subr.mxu0 0.0
    %775 = vmatpush1.msra.mxu0 0.0
    %776 = vmatprep.subr.mxu0 0.0
    %777 = vmatpush1.msra.mxu0 0.0
    %778 = vmatprep.subr.mxu0 0.0
    %779 = vmatpush1.msra.mxu0 0.0
    %780 = vmatprep.subr.mxu0 0.0
    %781 = vmatpush1.msra.mxu0 0.0
    %782 = vmatprep.subr.mxu0 0.0
    %783 = vmatpush1.msra.mxu0 0.0
    %784 = vmatprep.subr.mxu0 0.0
    %785 = vmatpush1.msra.mxu0 0.0
    %786 = vmatprep.subr.mxu0 0.0
    %787 = vmatpush1.msra.mxu0 0.0
    %788 = vmatprep.subr.mxu0 0.0
    %789 = vmatpush1.msra.mxu0 0.0
    %790 = vmatprep.subr.mxu0 0.0
    %791 = vmatpush1.msra.mxu0 0.0
    %792 = vmatprep.subr.mxu0 0.0
    %793 = vmatpush1.msra.mxu0 0.0
    %794 = vmatprep.subr.mxu0 0.0
    %795 = vmatpush1.msra.mxu0 0.0
    %796 = vmatprep.subr.mxu0 0.0
    %797 = vmatpush1.msra.mxu0 0.0
    %798 = vmatprep.subr.mxu0 0.0
    %799 = vmatpush1.msra.mxu0 0.0
    %800 = vmatprep.subr.mxu0 0.0
    %801 = vmatpush1.msra.mxu0 0.0
    %802 = vmatprep.subr.mxu0 0.0
    %803 = vmatpush1.msra.mxu0 0.0
    %804 = vmatprep.subr.mxu0 0.0
    %805 = vmatpush1.msra.mxu0 0.0
    %806 = vmatprep.subr.mxu0 0.0
    %807 = vmatpush1.msra.mxu0 0.0
    %808 = vmatprep.subr.mxu0 0.0
    %809 = vmatpush1.msra.mxu0 0.0
    %810 = vmatprep.subr.mxu0 0.0
    %811 = vmatpush1.msra.mxu0 0.0
    %812 = vmatprep.subr.mxu0 0.0
    %813 = vmatpush1.msra.mxu0 0.0
    %814 = vmatprep.subr.mxu0 0.0
    %815 = vmatpush1.msra.mxu0 0.0
    %816 = vmatprep.subr.mxu0 0.0
    %817 = vmatpush1.msra.mxu0 0.0
    %818 = vmatprep.subr.mxu0 0.0
    %819 = vmatpush1.msra.mxu0 0.0
    %820 = vmatprep.subr.mxu0 0.0
    %821 = vmatpush1.msra.mxu0 0.0
    %822 = vmatprep.subr.mxu0 0.0
    %823 = vmatpush1.msra.mxu0 0.0
    %824 = vmatprep.subr.mxu0 0.0
    %825 = vmatpush1.msra.mxu0 0.0
    %826 = vmatprep.mubr.f32.mxu0 0.0
    %827 = vmatmul.mubr.f32.gmra.mrb[0].mxu0 %v760
    %v828 = vpop.f32.mrb[0].mxu0
    %v829 = vadd.f32 %v757, %v828
    %v830 = vpop.f32.mrb[0].mxu0
    %831 = vdwg.mxu0
    %v832 = vld [vmem:[%s13] sm:$0x1f]
    %v833 = vld [vmem:[%s17] sm:$0x1f]
    %v834 = vlaneseq
    %v835 = vshrl.u32 %v834, 7
    %v836 = vsub.s32 1, %v835
    %v837 = vrot.slane %v832, %v836
    %v838 = vmul.f32 %v837, %v829
    %v839 = vlaneseq
    %v840 = vshrl.u32 %v839, 7
    %v841 = vsub.s32 2, %v840
    %v842 = vrot.slane %v832, %v841
    %v843 = vadd.f32 %v838, %v842
    %v844 = vxor.u32 %v843, 2147483648
    %v845 = vmul.f32 %v844, 1.442695
    %v846 = vpow.pop %v845
    %v847 = vadd.f32 %v846, 1.0
    %v848 = vrcp.pop %v847
    %v849 = vmul.f32 1.0, %v848
    %v850 = vlaneseq
    %v851 = vshrl.u32 %v850, 7
    %v852 = vsub.s32 0, %v851
    %v853 = vrot.slane %v832, %v852
    %v854 = vmul.f32 %v853, %v849
    %v855 = vlaneseq
    %v856 = vshrl.u32 %v855, 7
    %v857 = vsub.s32 3, %v856
    %v858 = vrot.slane %v832, %v857
    %v859 = vmul.f32 %v858, %v829
    %v860 = vadd.f32 %v854, %v859
    %v861 = vlaneseq
    %v862 = vshrl.u32 %v861, 7
    %v863 = vsub.s32 4, %v862
    %v864 = vrot.slane %v832, %v863
    %v865 = vadd.f32 %v860, %v864
    %v866 = vlaneseq
    %v867 = vshrl.u32 %v866, 7
    %v868 = vsub.s32 1, %v867
    %v869 = vrot.slane %v833, %v868
    %v870 = vmul.f32 %v869, %v829
    %v871 = vlaneseq
    %v872 = vshrl.u32 %v871, 7
    %v873 = vsub.s32 2, %v872
    %v874 = vrot.slane %v833, %v873
    %v875 = vadd.f32 %v870, %v874
    %v876 = vxor.u32 %v875, 2147483648
    %v877 = vmul.f32 %v876, 1.442695
    %v878 = vpow.pop %v877
    %v879 = vadd.f32 %v878, 1.0
    %v880 = vrcp.pop %v879
    %v881 = vmul.f32 1.0, %v880
    %v882 = vlaneseq
    %v883 = vshrl.u32 %v882, 7
    %v884 = vsub.s32 0, %v883
    %v885 = vrot.slane %v833, %v884
    %v886 = vmul.f32 %v885, %v881
    %v887 = vlaneseq
    %v888 = vshrl.u32 %v887, 7
    %v889 = vsub.s32 3, %v888
    %v890 = vrot.slane %v833, %v889
    %v891 = vmul.f32 %v890, %v829
    %v892 = vadd.f32 %v886, %v891
    %v893 = vlaneseq
    %v894 = vshrl.u32 %v893, 7
    %v895 = vsub.s32 4, %v894
    %v896 = vrot.slane %v833, %v895
    %v897 = vadd.f32 %v892, %v896
    %v898 = vsub.f32 %v82, %v865
    %v899 = vmul.f32 %v898, %v897
    %v900 = vadd.f32 %v899, %v865
    %v901 = vsub.f32 %v81, %v900
    %v902 = vmul.f32 %v901, %v901
    %v903 = vsel %vm92, %v902, 0.0
    %904 = vadd.xlane.f32.xlu0 %v903
    %v905 = vpop.xlane.xlu0 %904
    %v906 = vrot.slane %v905, 4
    %v907 = vadd.f32 %v905, %v906
    %v908 = vrot.slane %v907, 2
    %v909 = vadd.f32 %v907, %v908
    %v910 = vrot.slane %v909, 1
    %v911 = vadd.f32 %v909, %v910
    %s912 = vtos %v911
    %v913 = vrcp.pop 128.0
    %s914 = vtos %v913
    %s915 = smul.f32 %s912, %s914
    %s916 = sadd.f32 %s915, 0.0
    %v917 = vsub.f32 %v176, %v747
    %v918 = vmul.f32 %v917, %v917
    %v919 = vsel %vm191, %v918, 0.0
    %920 = vadd.xlane.f32.xlu0 %v919
    %v921 = vpop.xlane.xlu0 %920
    %v922 = vrot.slane %v921, 4
    %v923 = vadd.f32 %v921, %v922
    %v924 = vrot.slane %v923, 2
    %v925 = vadd.f32 %v923, %v924
    %v926 = vrot.slane %v925, 1
    %v927 = vadd.f32 %v925, %v926
    %s928 = vtos %v927
    %v929 = vrcp.pop 256.0
    %s930 = vtos %v929
    %s931 = smul.f32 %s928, %s930
    %s932 = sadd.f32 %s916, %s931
    %v933 = vsub.f32 %v275, %v594
    %v934 = vmul.f32 %v933, %v933
    %v935 = vsel %vm191, %v934, 0.0
    %936 = vadd.xlane.f32.xlu0 %v935
    %v937 = vpop.xlane.xlu0 %936
    %v938 = vrot.slane %v937, 4
    %v939 = vadd.f32 %v937, %v938
    %v940 = vrot.slane %v939, 2
    %v941 = vadd.f32 %v939, %v940
    %v942 = vrot.slane %v941, 1
    %v943 = vadd.f32 %v941, %v942
    %s944 = vtos %v943
    %v945 = vrcp.pop 256.0
    %s946 = vtos %v945
    %s947 = smul.f32 %s944, %s946
    %s948 = sadd.f32 %s932, %s947
    %v949 = vsub.f32 %v373, %v443
    %v950 = vmul.f32 %v949, %v949
    %v951 = vsel %vm452, %v950, 0.0
    %952 = vadd.xlane.f32.xlu0 %v951
    %v953 = vpop.xlane.xlu0 %952
    %v954 = vrot.slane %v953, 4
    %v955 = vadd.f32 %v953, %v954
    %v956 = vrot.slane %v955, 2
    %v957 = vadd.f32 %v955, %v956
    %v958 = vrot.slane %v957, 1
    %v959 = vadd.f32 %v957, %v958
    %s960 = vtos %v959
    %v961 = vrcp.pop 64.0
    %s962 = vtos %v961
    %s963 = smul.f32 %s960, %s962
    %s964 = sadd.f32 %s948, %s963
    %965 = vst.msk [vmem:[#allocation2] sm:$0xff] %vm452, %v373
    %v966 = vstv %s964
    %vm967 = vcmask 0
    %968 = vst.msk [vmem:[#allocation4] sm:$0x1] %vm967, %v966
    // Predicated region
    $region98: #{ladder_forward.1} parent=1 // pred_check
      _
    $region99: #{ladder_forward.1} parent=1 // pred_check_branch
      %970 = sbr.rel (0) target = $region101
    $region100: #{ladder_forward.1} parent=1 // pred_region
      %s972 = ssub.s32 128, 128
      %973 = vsyncadd [#allocation3], %s972
      %s975 = sshll.u32 [#allocation2], 4
      %s976 = int_to_ptr.vmem [resolvable:$true] %s975
      %978 = dma.vmem_to_hbm [thread:$0]  %s976, 128, %s24, [#allocation3]
    $region101: #{ladder_forward.1} parent=1 // pred_fallthru
      _
    // Predicated region
    $region102: #{ladder_forward.1} parent=1 // pred_check
      _
    $region103: #{ladder_forward.1} parent=1 // pred_check_branch
      %980 = sbr.rel (0) target = $region105
    $region104: #{ladder_forward.1} parent=1 // pred_region
      %s982 = ssub.s32 16, 16
      %983 = vsyncadd [#allocation5], %s982
      %s985 = sshll.u32 [#allocation4], 4
      %s986 = int_to_ptr.vmem [resolvable:$true] %s985
      %988 = dma.vmem_to_hbm [thread:$0]  %s986, 16, %s25, [#allocation5]
    $region105: #{ladder_forward.1} parent=1 // pred_fallthru
      _
    // Predicated region
    $region106: #{ladder_forward.1} parent=1 // pred_check
      _
    $region107: #{ladder_forward.1} parent=1 // pred_check_branch
      %990 = sbr.rel (0) target = $region109
    $region108: #{ladder_forward.1} parent=1 // pred_region
      %991 = dma.done [#allocation3], 128
    $region109: #{ladder_forward.1} parent=1 // pred_fallthru
      _
    // Predicated region
    $region110: #{ladder_forward.1} parent=1 // pred_check
      _
    $region111: #{ladder_forward.1} parent=1 // pred_check_branch
      %993 = sbr.rel (0) target = $region113
    $region112: #{ladder_forward.1} parent=1 // pred_region
      %994 = dma.done [#allocation5], 16
    $region113: #{ladder_forward.1} parent=1 // pred_fallthru
      _
    %995 = vsyncpa [#allocation3], 1
    %996 = vsyncpa [#allocation5], 1

</llo_original>
